<compile_context>
chip_gen: v7x
topology: tpu7x:2x2x1
jax: 0.10.0
libtpu: 0.0.40
codegen_flags: <defaults>
</compile_context>

<pallas_src>
import functools
import math

import jax
import jax.numpy as jnp
import numpy as np
from jax import lax
from jax.experimental import pallas as pl
from jax.experimental.pallas import tpu as pltpu


def _dot(a, b):
    return jnp.dot(a, b, preferred_element_type=jnp.float32)


def _gelu_tanh(z):
    return 0.5 * z * (1.0 + jnp.tanh(0.7978845608028654 * (z + 0.044715 * z * z * z)))


def _chip_vmem_bytes():
    try:
        return int(pltpu.get_tpu_info().vmem_capacity_bytes)
    except Exception:
        return 64 * 1024 * 1024


def _vmem_limit(block_bytes, scratch_bytes=0):
    # double-buffered pipeline blocks + scratch + headroom, clamped to the chip.
    need = 2 * int(block_bytes) + int(scratch_bytes) + (4 << 20)
    cap = int(0.6 * _chip_vmem_bytes())
    return int(max(min(need, cap), 16 << 20))


def _arr_bytes(a):
    return int(np.prod(a.shape)) * int(a.dtype.itemsize)


# -----------------------------------------------------------------------------
# Kernel 1: AdaLN conditioning + LayerNorm/modulation + fused q/k/v projection
#           + RMSNorm + RoPE, writing head-major bf16 q/k/v.
# -----------------------------------------------------------------------------
def _proj_rope_kernel(x_ref, t_ref,
                      wada_ref, bada_ref,
                      wq_ref, bq_ref, wk_ref, bk_ref, wv_ref, bv_ref,
                      qn_ref, kn_ref,
                      cosA_ref, cosB_ref, sinA_ref, sinB_ref,
                      q_out_ref, k_out_ref, v_out_ref, mods_ref,
                      *, num_heads, head_dim):
    H, Dh = num_heads, head_dim
    Dh2 = Dh // 2
    I2 = H * Dh2

    x = x_ref[...]                            # (s_tile, D) f32
    t = t_ref[...]                            # (1, D) f32
    D = x.shape[-1]

    # AdaLayerNorm conditioning: one fused (1,D)x(D,6D) matmul.
    silu_t = (t * jax.nn.sigmoid(t)).astype(jnp.bfloat16)
    emb = _dot(silu_t, wada_ref[...]) + bada_ref[...]          # (1, 6D) f32
    mods_ref[...] = emb
    shift_msa = emb[:, 0:D]
    scale_msa = emb[:, D:2 * D]

    # LayerNorm (no affine, eps=1e-6) + modulation, f32.
    mean = jnp.mean(x, axis=-1, keepdims=True)
    var = jnp.mean((x - mean) ** 2, axis=-1, keepdims=True)
    nh = (x - mean) * lax.rsqrt(var + 1e-6) * (1.0 + scale_msa) + shift_msa
    nh_bf = nh.astype(jnp.bfloat16)

    # Full-width projections (bf16 operands, f32 accumulation).
    # wq/wk columns are host-permuted to [all-head evens | all-head odds].
    q = _dot(nh_bf, wq_ref[...]) + bq_ref[...]                 # (s_tile, inner)
    k = _dot(nh_bf, wk_ref[...]) + bk_ref[...]                 # (s_tile, inner)
    v = _dot(nh_bf, wv_ref[...]) + bv_ref[...]                 # (s_tile, inner)

    # RMSNorm over the full inner dim (permutation invariant); the SDPA
    # 1/sqrt(Dh) scale is pre-folded into qn_ref on the host.
    q = q * lax.rsqrt(jnp.mean(q * q, axis=-1, keepdims=True) + 1e-6) * qn_ref[...]
    k = k * lax.rsqrt(jnp.mean(k * k, axis=-1, keepdims=True) + 1e-6) * kn_ref[...]

    # RoPE: pure element-wise math on the [evens | odds] layout.
    qa, qb = q[:, :I2], q[:, I2:]
    ka, kb = k[:, :I2], k[:, I2:]
    cosA = cosA_ref[...]
    cosB = cosB_ref[...]
    sinA = sinA_ref[...]
    sinB = sinB_ref[...]
    qa_r = qa * cosA - qb * sinA
    qb_r = qb * cosB + qa * sinB
    ka_r = ka * cosA - kb * sinA
    kb_r = kb * cosB + ka * sinB

    # Scatter to head-major (H, s_tile, Dh) bf16 outputs; per-head layout is
    # [rotated evens | rotated odds] for q/k (consistent between them, so the
    # Dh contraction in the attention kernel is unchanged) and the original
    # order for v (so the o-proj weight needs no permutation).
    for h in range(H):
        sl = slice(h * Dh2, (h + 1) * Dh2)
        q_out_ref[h] = jnp.concatenate([qa_r[:, sl], qb_r[:, sl]],
                                       axis=-1).astype(jnp.bfloat16)
        k_out_ref[h] = jnp.concatenate([ka_r[:, sl], kb_r[:, sl]],
                                       axis=-1).astype(jnp.bfloat16)
        v_out_ref[h] = v[:, h * Dh:(h + 1) * Dh].astype(jnp.bfloat16)


# -----------------------------------------------------------------------------
# Kernel 2: flash attention (q-tiled, kv-tiled, online softmax over all heads)
#           + full-width o-projection + residual + norm3 + FeedForward.
# -----------------------------------------------------------------------------
def _attn_mlp_kernel(x_ref, mods_ref, q_ref, k_ref, v_ref,
                     wo_ref, bo_ref, n3_ref, w1_ref, b1_ref, w2_ref, b2_ref,
                     out_ref,
                     m_scr, l_scr, acc_scr,
                     *, num_heads, head_dim):
    H, Dh = num_heads, head_dim
    ki = pl.program_id(2)
    n_kv = pl.num_programs(2)

    @pl.when(ki == 0)
    def _():
        m_scr[...] = jnp.full(m_scr.shape, -jnp.inf, jnp.float32)
        l_scr[...] = jnp.zeros(l_scr.shape, jnp.float32)
        acc_scr[...] = jnp.zeros(acc_scr.shape, jnp.float32)

    q = q_ref[...]                            # (H, q_tile, Dh)  bf16 (scaled, RoPE'd)
    k = k_ref[...]                            # (H, kv_tile, Dh) bf16 (RoPE'd)
    v = v_ref[...]                            # (H, kv_tile, Dh) bf16

    s = jnp.einsum("hqd,hkd->hqk", q, k,
                   preferred_element_type=jnp.float32)           # (H, q_tile, kv_tile)
    m_prev = m_scr[...]
    m_new = jnp.maximum(m_prev, jnp.max(s, axis=-1, keepdims=True))
    alpha = jnp.exp(m_prev - m_new)
    p = jnp.exp(s - m_new)
    l_scr[...] = alpha * l_scr[...] + jnp.sum(p, axis=-1, keepdims=True)
    acc_scr[...] = alpha * acc_scr[...] + jnp.einsum(
        "hqk,hkd->hqd", p.astype(jnp.bfloat16), v,
        preferred_element_type=jnp.float32)
    m_scr[...] = m_new

    @pl.when(ki == n_kv - 1)
    def _():
        x = x_ref[...]                        # (q_tile, D) f32
        D = x.shape[-1]
        mods = mods_ref[...]                  # (1, 6D) f32
        gate_msa = mods[:, 2 * D:3 * D]
        shift_mlp = mods[:, 3 * D:4 * D]
        scale_mlp = mods[:, 4 * D:5 * D]
        gate_mlp = mods[:, 5 * D:6 * D]

        # Softmax normalization (exact reciprocal) + head concat into a
        # lane-dense (q_tile, inner) slab; single full-width o-projection.
        ah = acc_scr[...] / l_scr[...]        # (H, q_tile, Dh) f32
        attn = jnp.concatenate([ah[h] for h in range(H)], axis=-1)
        o = _dot(attn.astype(jnp.bfloat16), wo_ref[...]) + bo_ref[...]   # (q_tile, D)

        h1 = x + gate_msa * o

        # norm3 (RMSNorm) + AdaLN-MLP modulation + FeedForward (GELU tanh).
        rms3 = h1 * lax.rsqrt(jnp.mean(h1 * h1, axis=-1, keepdims=True) + 1e-6)
        mod = (n3_ref[...] * rms3) * (1.0 + scale_mlp) + shift_mlp
        z = _dot(mod.astype(jnp.bfloat16), w1_ref[...]) + b1_ref[...]    # (q_tile, hid)
        g = _gelu_tanh(z)
        ff = _dot(g.astype(jnp.bfloat16), w2_ref[...]) + b2_ref[...]     # (q_tile, D)

        out_ref[...] = h1 + gate_mlp * ff


# -----------------------------------------------------------------------------
# Wrapper: host-side layout plumbing + the two pallas_calls.
# -----------------------------------------------------------------------------
def transformer_block(x, timestep, rope_pos_embed, params, *, num_heads, head_dim,
                      s_tile=None, q_tile=None, kv_tile=None):
    B, S, D = map(int, x.shape)
    H, Dh = num_heads, head_dim
    assert Dh % 2 == 0
    Dh2 = Dh // 2
    inner = H * Dh
    I2 = inner // 2
    f32, bf16 = jnp.float32, jnp.bfloat16

    s_tile = min(S, 512) if s_tile is None else s_tile
    q_tile = min(S, 256) if q_tile is None else q_tile
    kv_tile = min(S, 512) if kv_tile is None else kv_tile
    assert S % s_tile == 0 and S % q_tile == 0 and S % kv_tile == 0
    n_s, n_q, n_kv = S // s_tile, S // q_tile, S // kv_tile

    # ---- host-side layout plumbing (no compute hoisted) ----
    def perm_qk_cols(w):       # (D, inner) -> [all-head evens | all-head odds]
        w3 = w.reshape(D, H, Dh)
        return jnp.concatenate([w3[..., 0::2].reshape(D, I2),
                                w3[..., 1::2].reshape(D, I2)], axis=-1)

    def perm_qk_vec(vv):       # (1, inner) -> [all-head evens | all-head odds]
        v3 = vv.reshape(H, Dh)
        return jnp.concatenate([v3[:, 0::2].reshape(1, I2),
                                v3[:, 1::2].reshape(1, I2)], axis=-1)

    att_scale = 1.0 / math.sqrt(Dh)

    wq_p = perm_qk_cols(params["wq"]).astype(bf16)
    wk_p = perm_qk_cols(params["wk"]).astype(bf16)
    wv = params["wv"].astype(bf16)
    bq_p = perm_qk_vec(params["bq"]).astype(f32)
    bk_p = perm_qk_vec(params["bk"]).astype(f32)
    bv = params["bv"].astype(f32)
    qn_p = (perm_qk_vec(params["qn"]) * att_scale).astype(f32)   # SDPA scale folded
    kn_p = perm_qk_vec(params["kn"]).astype(f32)

    wada = params["w_ada"].astype(bf16)
    bada = params["b_ada"].astype(f32)
    wo = params["wo"].astype(bf16)
    bo = params["bo"].astype(f32)
    n3 = params["n3"].astype(f32)
    w1 = params["w1"].astype(bf16)
    b1 = params["b1"].astype(f32)
    w2 = params["w2"].astype(bf16)
    b2 = params["b2"].astype(f32)

    # RoPE tables tiled across heads to match the [evens | odds] column layout.
    cos = rope_pos_embed[..., 0].astype(f32)          # (S, Dh)
    sin = rope_pos_embed[..., 1].astype(f32)
    cosA = jnp.tile(cos[:, 0::2], (1, H))             # (S, I2)
    cosB = jnp.tile(cos[:, 1::2], (1, H))
    sinA = jnp.tile(sin[:, 0::2], (1, H))
    sinB = jnp.tile(sin[:, 1::2], (1, H))

    x32 = x.astype(f32)
    t3 = timestep.reshape(B, 1, D).astype(f32)

    proj_weights = (wada, bada, wq_p, bq_p, wk_p, bk_p, wv, bv, qn_p, kn_p)
    rope_tables = (cosA, cosB, sinA, sinB)
    attn_weights = (wo, bo, n3, w1, b1, w2, b2)

    # ---- kernel 1: projections / RoPE ----
    blk1 = (s_tile * D * 4 + D * 4
            + sum(_arr_bytes(w) for w in proj_weights)
            + 4 * s_tile * I2 * 4
            + 3 * H * s_tile * Dh * 2 + 6 * D * 4)
    vmem1 = _vmem_limit(blk1)

    def full2(a):
        return pl.BlockSpec(a.shape, lambda b, si: (0, 0))

    q_hm, k_hm, v_hm, mods = pl.pallas_call(
        functools.partial(_proj_rope_kernel, num_heads=H, head_dim=Dh),
        out_shape=(
            jax.ShapeDtypeStruct((B, H, S, Dh), bf16),   # rotated, scaled q
            jax.ShapeDtypeStruct((B, H, S, Dh), bf16),   # rotated k
            jax.ShapeDtypeStruct((B, H, S, Dh), bf16),   # v
            jax.ShapeDtypeStruct((B, 1, 6 * D), f32),    # AdaLN modulation vectors
        ),
        grid_spec=pltpu.PrefetchScalarGridSpec(
            num_scalar_prefetch=0,
            grid=(B, n_s),
            in_specs=[
                pl.BlockSpec((None, s_tile, D), lambda b, si: (b, si, 0)),   # x
                pl.BlockSpec((None, 1, D), lambda b, si: (b, 0, 0)),          # timestep
            ] + [full2(w) for w in proj_weights]
              + [pl.BlockSpec((s_tile, I2), lambda b, si: (si, 0))
                 for _ in rope_tables],
            out_specs=[
                pl.BlockSpec((None, H, s_tile, Dh), lambda b, si: (b, 0, si, 0)),
                pl.BlockSpec((None, H, s_tile, Dh), lambda b, si: (b, 0, si, 0)),
                pl.BlockSpec((None, H, s_tile, Dh), lambda b, si: (b, 0, si, 0)),
                pl.BlockSpec((None, 1, 6 * D), lambda b, si: (b, 0, 0)),
            ],
        ),
        compiler_params=pltpu.CompilerParams(
            dimension_semantics=("parallel", "arbitrary"),
            vmem_limit_bytes=vmem1),
    )(x32, t3, *proj_weights, *rope_tables)

    # ---- kernel 2: flash attention + o-proj + residual + norm3 + MLP ----
    blk2 = (q_tile * D * 4 + 6 * D * 4
            + H * q_tile * Dh * 2 + 2 * H * kv_tile * Dh * 2
            + sum(_arr_bytes(w) for w in attn_weights)
            + q_tile * D * 4)
    scr2 = H * q_tile * (2 * 128 + max(Dh, 128)) * 4
    vmem2 = _vmem_limit(blk2, scr2)

    def full3(a):
        return pl.BlockSpec(a.shape, lambda b, qi, ki: (0, 0))

    out = pl.pallas_call(
        functools.partial(_attn_mlp_kernel, num_heads=H, head_dim=Dh),
        out_shape=jax.ShapeDtypeStruct((B, S, D), f32),
        grid_spec=pltpu.PrefetchScalarGridSpec(
            num_scalar_prefetch=0,
            grid=(B, n_q, n_kv),
            in_specs=[
                pl.BlockSpec((None, q_tile, D), lambda b, qi, ki: (b, qi, 0)),        # x
                pl.BlockSpec((None, 1, 6 * D), lambda b, qi, ki: (b, 0, 0)),           # mods
                pl.BlockSpec((None, H, q_tile, Dh), lambda b, qi, ki: (b, 0, qi, 0)),  # q
                pl.BlockSpec((None, H, kv_tile, Dh), lambda b, qi, ki: (b, 0, ki, 0)), # k
                pl.BlockSpec((None, H, kv_tile, Dh), lambda b, qi, ki: (b, 0, ki, 0)), # v
            ] + [full3(w) for w in attn_weights],
            out_specs=pl.BlockSpec((None, q_tile, D), lambda b, qi, ki: (b, qi, 0)),
            scratch_shapes=[
                pltpu.VMEM((H, q_tile, 1), jnp.float32),     # running max
                pltpu.VMEM((H, q_tile, 1), jnp.float32),     # running sum
                pltpu.VMEM((H, q_tile, Dh), jnp.float32),    # output accumulator
            ]),
        compiler_params=pltpu.CompilerParams(
            dimension_semantics=("parallel", "parallel", "arbitrary"),
            vmem_limit_bytes=vmem2),
    )(x32, mods, q_hm, k_hm, v_hm, *attn_weights)

    return out


# -----------------------------------------------------------------------------
# Pure-JAX reference (mirrors the PyTorch TransformerBlock forward, fp32)
# -----------------------------------------------------------------------------
def reference_block(x, timestep, rope_pos_embed, p, *, num_heads, head_dim):
    B, S, D = x.shape
    H, Dh = num_heads, head_dim
    cos = rope_pos_embed[..., 0]
    sin = rope_pos_embed[..., 1]

    silu_t = timestep * jax.nn.sigmoid(timestep)
    emb = silu_t @ p["w_ada"] + p["b_ada"][0]
    (shift_msa, scale_msa, gate_msa,
     shift_mlp, scale_mlp, gate_mlp) = jnp.split(emb[:, None, :], 6, axis=-1)

    mean = x.mean(-1, keepdims=True)
    var = ((x - mean) ** 2).mean(-1, keepdims=True)
    ln = (x - mean) * jax.lax.rsqrt(var + 1e-6)
    nh = ln * (1.0 + scale_msa) + shift_msa

    q = nh @ p["wq"] + p["bq"][0]
    k = nh @ p["wk"] + p["bk"][0]
    v = nh @ p["wv"] + p["bv"][0]

    def rms(z, w):
        return w * (z * jax.lax.rsqrt((z * z).mean(-1, keepdims=True) + 1e-6))

    q = rms(q, p["qn"][0])
    k = rms(k, p["kn"][0])

    qh = q.reshape(B, S, H, Dh).transpose(0, 2, 1, 3)
    kh = k.reshape(B, S, H, Dh).transpose(0, 2, 1, 3)
    vh = v.reshape(B, S, H, Dh).transpose(0, 2, 1, 3)

    def rope_apply(z):
        zr = z.reshape(*z.shape[:-1], Dh // 2, 2)
        zrot = jnp.stack([-zr[..., 1], zr[..., 0]], axis=-1).reshape(z.shape)
        return z * cos[None, None] + zrot * sin[None, None]

    qh = rope_apply(qh)
    kh = rope_apply(kh)

    s = jnp.einsum("bhqd,bhkd->bhqk", qh, kh) / jnp.sqrt(jnp.float32(Dh))
    attn = jax.nn.softmax(s, axis=-1)
    a = jnp.einsum("bhqk,bhkd->bhqd", attn, vh).transpose(0, 2, 1, 3).reshape(B, S, H * Dh)
    o = a @ p["wo"] + p["bo"][0]

    h1 = x + gate_msa * o
    rn = rms(h1, p["n3"][0])
    mod = rn * (1.0 + scale_mlp) + shift_mlp
    z = mod @ p["w1"] + p["b1"][0]
    g = 0.5 * z * (1.0 + jnp.tanh(jnp.sqrt(2.0 / jnp.pi) * (z + 0.044715 * z ** 3)))
    ff = g @ p["w2"] + p["b2"][0]
    return h1 + gate_mlp * ff


# -----------------------------------------------------------------------------
# Main
# -----------------------------------------------------------------------------
if __name__ == "__main__":
    B, S = 2, 8
    num_heads, head_dim = 4, 8
    D = num_heads * head_dim      # embed dim (= inner dim of self-attention)
    inner = num_heads * head_dim
    hidden_ff = 4 * D             # FeedForward default mult=4

    key = jax.random.PRNGKey(0)
    ks = jax.random.split(key, 20)

    def init(k, shape, scale=0.05):
        return (scale * jax.random.normal(k, shape)).astype(jnp.float32)

    params = {
        "w_ada": init(ks[0], (D, 6 * D)),
        "b_ada": init(ks[1], (1, 6 * D)),
        "wq": init(ks[2], (D, inner)),
        "bq": init(ks[12], (1, inner)),
        "wk": init(ks[3], (D, inner)),
        "bk": init(ks[13], (1, inner)),
        "wv": init(ks[4], (D, inner)),
        "bv": init(ks[14], (1, inner)),
        "wo": init(ks[5], (inner, D)),
        "bo": init(ks[15], (1, D)),
        "qn": jnp.ones((1, inner), jnp.float32),
        "kn": jnp.ones((1, inner), jnp.float32),
        "n3": jnp.ones((1, D), jnp.float32),
        "w1": init(ks[6], (D, hidden_ff)),
        "b1": init(ks[7], (1, hidden_ff)),
        "w2": init(ks[8], (hidden_ff, D)),
        "b2": init(ks[9], (1, D)),
    }

    x = jax.random.normal(ks[10], (B, S, D), jnp.float32)
    timestep = jax.random.normal(ks[11], (B, D), jnp.float32)

    # rope_pos_embed: (S, head_dim, 2), pairwise-repeated cos/sin
    pos = np.arange(S, dtype=np.float32)[:, None]
    freqs = 1.0 / (10000.0 ** (np.arange(0, head_dim, 2, dtype=np.float32) / head_dim))
    ang = pos * freqs[None, :]                               # (S, Dh/2)
    cos = np.repeat(np.cos(ang), 2, axis=-1)                 # (S, Dh)
    sin = np.repeat(np.sin(ang), 2, axis=-1)                 # (S, Dh)
    rope_pos_embed = jnp.asarray(np.stack([cos, sin], axis=-1), jnp.float32)

    out = transformer_block(x, timestep, rope_pos_embed, params,
                            num_heads=num_heads, head_dim=head_dim)
    out = jax.block_until_ready(out)

    ref = reference_block(x, timestep, rope_pos_embed, params,
                          num_heads=num_heads, head_dim=head_dim)
    ref = jax.block_until_ready(ref)

    # bf16 matmul operands -> looser tolerance than a pure-f32 kernel
    np.testing.assert_allclose(np.asarray(out), np.asarray(ref), rtol=3e-2, atol=3e-2)
    print("KERNEL_OK")
</pallas_src>

<mosaic_0001>
module attributes {stable_mosaic.version = 11 : i64} {
  func.func @_proj_rope_kernel(%arg0: i32, %arg1: i32, %arg2: memref<1x8x32xf32, #tpu.memory_space<vmem>>, %arg3: memref<1x1x32xf32, #tpu.memory_space<vmem>>, %arg4: memref<32x192xbf16, #tpu.memory_space<vmem>>, %arg5: memref<1x192xf32, #tpu.memory_space<vmem>>, %arg6: memref<32x32xbf16, #tpu.memory_space<vmem>>, %arg7: memref<1x32xf32, #tpu.memory_space<vmem>>, %arg8: memref<32x32xbf16, #tpu.memory_space<vmem>>, %arg9: memref<1x32xf32, #tpu.memory_space<vmem>>, %arg10: memref<32x32xbf16, #tpu.memory_space<vmem>>, %arg11: memref<1x32xf32, #tpu.memory_space<vmem>>, %arg12: memref<1x32xf32, #tpu.memory_space<vmem>>, %arg13: memref<1x32xf32, #tpu.memory_space<vmem>>, %arg14: memref<8x16xf32, #tpu.memory_space<vmem>>, %arg15: memref<8x16xf32, #tpu.memory_space<vmem>>, %arg16: memref<8x16xf32, #tpu.memory_space<vmem>>, %arg17: memref<8x16xf32, #tpu.memory_space<vmem>>, %arg18: memref<1x4x8x8xbf16, #tpu.memory_space<vmem>>, %arg19: memref<1x4x8x8xbf16, #tpu.memory_space<vmem>>, %arg20: memref<1x4x8x8xbf16, #tpu.memory_space<vmem>>, %arg21: memref<1x1x192xf32, #tpu.memory_space<vmem>>) attributes {dimension_semantics = [#tpu.dimension_semantics<parallel>, #tpu.dimension_semantics<arbitrary>], iteration_bounds = array<i64: 2, 1>, scalar_prefetch = 0 : i64, scratch_operands = 0 : i64, tpu.core_type = #tpu.core_type<tc>, window_params = [{transform_indices = @transform_0, window_bounds = array<i64: 1, 8, 32>}, {transform_indices = @transform_1, window_bounds = array<i64: 1, 1, 32>}, {pipeline_mode = #tpu.pipeline_mode<synchronous>, transform_indices = @transform_2, window_bounds = array<i64: 32, 192>}, {pipeline_mode = #tpu.pipeline_mode<synchronous>, transform_indices = @transform_3, window_bounds = array<i64: 1, 192>}, {pipeline_mode = #tpu.pipeline_mode<synchronous>, transform_indices = @transform_4, window_bounds = array<i64: 32, 32>}, {pipeline_mode = #tpu.pipeline_mode<synchronous>, transform_indices = @transform_5, window_bounds = array<i64: 1, 32>}, {pipeline_mode = #tpu.pipeline_mode<synchronous>, transform_indices = @transform_6, window_bounds = array<i64: 32, 32>}, {pipeline_mode = #tpu.pipeline_mode<synchronous>, transform_indices = @transform_7, window_bounds = array<i64: 1, 32>}, {pipeline_mode = #tpu.pipeline_mode<synchronous>, transform_indices = @transform_8, window_bounds = array<i64: 32, 32>}, {pipeline_mode = #tpu.pipeline_mode<synchronous>, transform_indices = @transform_9, window_bounds = array<i64: 1, 32>}, {pipeline_mode = #tpu.pipeline_mode<synchronous>, transform_indices = @transform_10, window_bounds = array<i64: 1, 32>}, {pipeline_mode = #tpu.pipeline_mode<synchronous>, transform_indices = @transform_11, window_bounds = array<i64: 1, 32>}, {transform_indices = @transform_12, window_bounds = array<i64: 8, 16>}, {transform_indices = @transform_13, window_bounds = array<i64: 8, 16>}, {transform_indices = @transform_14, window_bounds = array<i64: 8, 16>}, {transform_indices = @transform_15, window_bounds = array<i64: 8, 16>}, {transform_indices = @transform_16, window_bounds = array<i64: 1, 4, 8, 8>}, {transform_indices = @transform_17, window_bounds = array<i64: 1, 4, 8, 8>}, {transform_indices = @transform_18, window_bounds = array<i64: 1, 4, 8, 8>}, {transform_indices = @transform_19, window_bounds = array<i64: 1, 1, 192>}]} {
    %c0 = arith.constant 0 : index
    %c0_0 = arith.constant 0 : index
    %c0_1 = arith.constant 0 : index
    %0 = vector.load %arg2[%c0, %c0_0, %c0_1] : memref<1x8x32xf32, #tpu.memory_space<vmem>>, vector<1x8x32xf32>
    %1 = vector.shape_cast %0 : vector<1x8x32xf32> to vector<8x32xf32>
    %c0_2 = arith.constant 0 : index
    %c0_3 = arith.constant 0 : index
    %c0_4 = arith.constant 0 : index
    %2 = vector.load %arg3[%c0_2, %c0_3, %c0_4] : memref<1x1x32xf32, #tpu.memory_space<vmem>>, vector<1x1x32xf32>
    %3 = vector.shape_cast %2 : vector<1x1x32xf32> to vector<1x32xf32>
    %4 = arith.negf %3 : vector<1x32xf32>
    %5 = math.exp %4 : vector<1x32xf32>
    %cst = arith.constant 1.000000e+00 : f32
    %6 = vector.broadcast %cst : f32 to vector<1x32xf32>
    %7 = arith.addf %6, %5 : vector<1x32xf32>
    %8 = arith.divf %6, %7 : vector<1x32xf32>
    %9 = arith.mulf %3, %8 : vector<1x32xf32>
    %10 = arith.truncf %9 : vector<1x32xf32> to vector<1x32xbf16>
    %c0_5 = arith.constant 0 : index
    %c0_6 = arith.constant 0 : index
    %11 = vector.load %arg4[%c0_5, %c0_6] : memref<32x192xbf16, #tpu.memory_space<vmem>>, vector<32x192xbf16>
    %cst_7 = arith.constant dense<0.000000e+00> : vector<1x192xf32>
    %12 = tpu.matmul %10, %11, %cst_7 {dimension_numbers = #tpu.dot_dimension_numbers<[1], [0], [0], [1], [0, 0, 1, 1], [], []>} : vector<1x32xbf16>, vector<32x192xbf16>, vector<1x192xf32> -> vector<1x192xf32>
    %c0_8 = arith.constant 0 : index
    %c0_9 = arith.constant 0 : index
    %13 = vector.load %arg5[%c0_8, %c0_9] : memref<1x192xf32, #tpu.memory_space<vmem>>, vector<1x192xf32>
    %14 = arith.addf %12, %13 : vector<1x192xf32>
    %c0_10 = arith.constant 0 : index
    %c0_11 = arith.constant 0 : index
    %c0_12 = arith.constant 0 : index
    %15 = vector.load %arg21[%c0_10, %c0_11, %c0_12] : memref<1x1x192xf32, #tpu.memory_space<vmem>>, vector<1x1x192xf32>
    %16 = vector.shape_cast %15 : vector<1x1x192xf32> to vector<1x192xf32>
    %17 = vector.shape_cast %14 : vector<1x192xf32> to vector<1x1x192xf32>
    tpu.vector_store %arg21[%c0_10, %c0_11, %c0_12], %17 {strides = array<i32>} : memref<1x1x192xf32, #tpu.memory_space<vmem>>, vector<1x1x192xf32>,
    %18 = vector.extract_strided_slice %14 {offsets = [0, 0], sizes = [1, 32], strides = [1, 1]} : vector<1x192xf32> to vector<1x32xf32>
    %19 = vector.extract_strided_slice %14 {offsets = [0, 32], sizes = [1, 32], strides = [1, 1]} : vector<1x192xf32> to vector<1x32xf32>
    %cst_13 = arith.constant dense<0.000000e+00> : vector<8xf32>
    %20 = vector.multi_reduction <add>, %1, %cst_13 [1] : vector<8x32xf32> to vector<8xf32>
    %21 = vector.shape_cast %20 : vector<8xf32> to vector<8x1xf32>
    %cst_14 = arith.constant 3.200000e+01 : f32
    %22 = vector.broadcast %cst_14 : f32 to vector<8x1xf32>
    %23 = arith.divf %21, %22 : vector<8x1xf32>
    %24 = vector.broadcast %23 : vector<8x1xf32> to vector<8x32xf32>
    %25 = arith.subf %1, %24 : vector<8x32xf32>
    %26 = arith.mulf %25, %25 : vector<8x32xf32>
    %cst_15 = arith.constant dense<0.000000e+00> : vector<8xf32>
    %27 = vector.multi_reduction <add>, %26, %cst_15 [1] : vector<8x32xf32> to vector<8xf32>
    %28 = vector.shape_cast %27 : vector<8xf32> to vector<8x1xf32>
    %cst_16 = arith.constant 3.200000e+01 : f32
    %29 = vector.broadcast %cst_16 : f32 to vector<8x1xf32>
    %30 = arith.divf %28, %29 : vector<8x1xf32>
    %31 = vector.broadcast %23 : vector<8x1xf32> to vector<8x32xf32>
    %32 = arith.subf %1, %31 : vector<8x32xf32>
    %cst_17 = arith.constant 9.99999997E-7 : f32
    %33 = vector.broadcast %cst_17 : f32 to vector<8x1xf32>
    %34 = arith.addf %30, %33 : vector<8x1xf32>
    %35 = math.rsqrt %34 : vector<8x1xf32>
    %36 = vector.broadcast %35 : vector<8x1xf32> to vector<8x32xf32>
    %37 = arith.mulf %32, %36 : vector<8x32xf32>
    %cst_18 = arith.constant 1.000000e+00 : f32
    %38 = vector.broadcast %cst_18 : f32 to vector<1x32xf32>
    %39 = arith.addf %38, %19 : vector<1x32xf32>
    %40 = vector.broadcast %39 : vector<1x32xf32> to vector<8x32xf32>
    %41 = arith.mulf %37, %40 : vector<8x32xf32>
    %42 = vector.broadcast %18 : vector<1x32xf32> to vector<8x32xf32>
    %43 = arith.addf %41, %42 : vector<8x32xf32>
    %44 = arith.truncf %43 : vector<8x32xf32> to vector<8x32xbf16>
    %c0_19 = arith.constant 0 : index
    %c0_20 = arith.constant 0 : index
    %45 = vector.load %arg6[%c0_19, %c0_20] : memref<32x32xbf16, #tpu.memory_space<vmem>>, vector<32x32xbf16>
    %cst_21 = arith.constant dense<0.000000e+00> : vector<8x32xf32>
    %46 = tpu.matmul %44, %45, %cst_21 {dimension_numbers = #tpu.dot_dimension_numbers<[1], [0], [0], [1], [0, 0, 1, 1], [], []>} : vector<8x32xbf16>, vector<32x32xbf16>, vector<8x32xf32> -> vector<8x32xf32>
    %c0_22 = arith.constant 0 : index
    %c0_23 = arith.constant 0 : index
    %47 = vector.load %arg7[%c0_22, %c0_23] : memref<1x32xf32, #tpu.memory_space<vmem>>, vector<1x32xf32>
    %48 = vector.broadcast %47 : vector<1x32xf32> to vector<8x32xf32>
    %49 = arith.addf %46, %48 : vector<8x32xf32>
    %c0_24 = arith.constant 0 : index
    %c0_25 = arith.constant 0 : index
    %50 = vector.load %arg8[%c0_24, %c0_25] : memref<32x32xbf16, #tpu.memory_space<vmem>>, vector<32x32xbf16>
    %cst_26 = arith.constant dense<0.000000e+00> : vector<8x32xf32>
    %51 = tpu.matmul %44, %50, %cst_26 {dimension_numbers = #tpu.dot_dimension_numbers<[1], [0], [0], [1], [0, 0, 1, 1], [], []>} : vector<8x32xbf16>, vector<32x32xbf16>, vector<8x32xf32> -> vector<8x32xf32>
    %c0_27 = arith.constant 0 : index
    %c0_28 = arith.constant 0 : index
    %52 = vector.load %arg9[%c0_27, %c0_28] : memref<1x32xf32, #tpu.memory_space<vmem>>, vector<1x32xf32>
    %53 = vector.broadcast %52 : vector<1x32xf32> to vector<8x32xf32>
    %54 = arith.addf %51, %53 : vector<8x32xf32>
    %c0_29 = arith.constant 0 : index
    %c0_30 = arith.constant 0 : index
    %55 = vector.load %arg10[%c0_29, %c0_30] : memref<32x32xbf16, #tpu.memory_space<vmem>>, vector<32x32xbf16>
    %cst_31 = arith.constant dense<0.000000e+00> : vector<8x32xf32>
    %56 = tpu.matmul %44, %55, %cst_31 {dimension_numbers = #tpu.dot_dimension_numbers<[1], [0], [0], [1], [0, 0, 1, 1], [], []>} : vector<8x32xbf16>, vector<32x32xbf16>, vector<8x32xf32> -> vector<8x32xf32>
    %c0_32 = arith.constant 0 : index
    %c0_33 = arith.constant 0 : index
    %57 = vector.load %arg11[%c0_32, %c0_33] : memref<1x32xf32, #tpu.memory_space<vmem>>, vector<1x32xf32>
    %58 = vector.broadcast %57 : vector<1x32xf32> to vector<8x32xf32>
    %59 = arith.addf %56, %58 : vector<8x32xf32>
    %60 = arith.mulf %49, %49 : vector<8x32xf32>
    %cst_34 = arith.constant dense<0.000000e+00> : vector<8xf32>
    %61 = vector.multi_reduction <add>, %60, %cst_34 [1] : vector<8x32xf32> to vector<8xf32>
    %62 = vector.shape_cast %61 : vector<8xf32> to vector<8x1xf32>
    %cst_35 = arith.constant 3.200000e+01 : f32
    %63 = vector.broadcast %cst_35 : f32 to vector<8x1xf32>
    %64 = arith.divf %62, %63 : vector<8x1xf32>
    %cst_36 = arith.constant 9.99999997E-7 : f32
    %65 = vector.broadcast %cst_36 : f32 to vector<8x1xf32>
    %66 = arith.addf %64, %65 : vector<8x1xf32>
    %67 = math.rsqrt %66 : vector<8x1xf32>
    %68 = vector.broadcast %67 : vector<8x1xf32> to vector<8x32xf32>
    %69 = arith.mulf %49, %68 : vector<8x32xf32>
    %c0_37 = arith.constant 0 : index
    %c0_38 = arith.constant 0 : index
    %70 = vector.load %arg12[%c0_37, %c0_38] : memref<1x32xf32, #tpu.memory_space<vmem>>, vector<1x32xf32>
    %71 = vector.broadcast %70 : vector<1x32xf32> to vector<8x32xf32>
    %72 = arith.mulf %69, %71 : vector<8x32xf32>
    %73 = arith.mulf %54, %54 : vector<8x32xf32>
    %cst_39 = arith.constant dense<0.000000e+00> : vector<8xf32>
    %74 = vector.multi_reduction <add>, %73, %cst_39 [1] : vector<8x32xf32> to vector<8xf32>
    %75 = vector.shape_cast %74 : vector<8xf32> to vector<8x1xf32>
    %cst_40 = arith.constant 3.200000e+01 : f32
    %76 = vector.broadcast %cst_40 : f32 to vector<8x1xf32>
    %77 = arith.divf %75, %76 : vector<8x1xf32>
    %cst_41 = arith.constant 9.99999997E-7 : f32
    %78 = vector.broadcast %cst_41 : f32 to vector<8x1xf32>
    %79 = arith.addf %77, %78 : vector<8x1xf32>
    %80 = math.rsqrt %79 : vector<8x1xf32>
    %81 = vector.broadcast %80 : vector<8x1xf32> to vector<8x32xf32>
    %82 = arith.mulf %54, %81 : vector<8x32xf32>
    %c0_42 = arith.constant 0 : index
    %c0_43 = arith.constant 0 : index
    %83 = vector.load %arg13[%c0_42, %c0_43] : memref<1x32xf32, #tpu.memory_space<vmem>>, vector<1x32xf32>
    %84 = vector.broadcast %83 : vector<1x32xf32> to vector<8x32xf32>
    %85 = arith.mulf %82, %84 : vector<8x32xf32>
    %86 = vector.extract_strided_slice %72 {offsets = [0, 0], sizes = [8, 16], strides = [1, 1]} : vector<8x32xf32> to vector<8x16xf32>
    %87 = vector.extract_strided_slice %72 {offsets = [0, 16], sizes = [8, 16], strides = [1, 1]} : vector<8x32xf32> to vector<8x16xf32>
    %88 = vector.extract_strided_slice %85 {offsets = [0, 0], sizes = [8, 16], strides = [1, 1]} : vector<8x32xf32> to vector<8x16xf32>
    %89 = vector.extract_strided_slice %85 {offsets = [0, 16], sizes = [8, 16], strides = [1, 1]} : vector<8x32xf32> to vector<8x16xf32>
    %c0_44 = arith.constant 0 : index
    %c0_45 = arith.constant 0 : index
    %90 = vector.load %arg14[%c0_44, %c0_45] : memref<8x16xf32, #tpu.memory_space<vmem>>, vector<8x16xf32>
    %c0_46 = arith.constant 0 : index
    %c0_47 = arith.constant 0 : index
    %91 = vector.load %arg15[%c0_46, %c0_47] : memref<8x16xf32, #tpu.memory_space<vmem>>, vector<8x16xf32>
    %c0_48 = arith.constant 0 : index
    %c0_49 = arith.constant 0 : index
    %92 = vector.load %arg16[%c0_48, %c0_49] : memref<8x16xf32, #tpu.memory_space<vmem>>, vector<8x16xf32>
    %c0_50 = arith.constant 0 : index
    %c0_51 = arith.constant 0 : index
    %93 = vector.load %arg17[%c0_50, %c0_51] : memref<8x16xf32, #tpu.memory_space<vmem>>, vector<8x16xf32>
    %94 = arith.mulf %86, %90 : vector<8x16xf32>
    %95 = arith.mulf %87, %92 : vector<8x16xf32>
    %96 = arith.subf %94, %95 : vector<8x16xf32>
    %97 = arith.mulf %87, %91 : vector<8x16xf32>
    %98 = arith.mulf %86, %93 : vector<8x16xf32>
    %99 = arith.addf %97, %98 : vector<8x16xf32>
    %100 = arith.mulf %88, %90 : vector<8x16xf32>
    %101 = arith.mulf %89, %92 : vector<8x16xf32>
    %102 = arith.subf %100, %101 : vector<8x16xf32>
    %103 = arith.mulf %89, %91 : vector<8x16xf32>
    %104 = arith.mulf %88, %93 : vector<8x16xf32>
    %105 = arith.addf %103, %104 : vector<8x16xf32>
    %106 = vector.extract_strided_slice %96 {offsets = [0, 0], sizes = [8, 4], strides = [1, 1]} : vector<8x16xf32> to vector<8x4xf32>
    %107 = vector.extract_strided_slice %99 {offsets = [0, 0], sizes = [8, 4], strides = [1, 1]} : vector<8x16xf32> to vector<8x4xf32>
    %108 = tpu.concatenate %106, %107 in 1 : vector<8x4xf32>, vector<8x4xf32> -> vector<8x8xf32>
    %109 = arith.truncf %108 : vector<8x8xf32> to vector<8x8xbf16>
    %c0_52 = arith.constant 0 : index
    %c0_53 = arith.constant 0 : index
    %c0_54 = arith.constant 0 : index
    %c0_55 = arith.constant 0 : index
    %110 = vector.load %arg18[%c0_52, %c0_53, %c0_54, %c0_55] : memref<1x4x8x8xbf16, #tpu.memory_space<vmem>>, vector<1x1x8x8xbf16>
    %111 = vector.shape_cast %110 : vector<1x1x8x8xbf16> to vector<8x8xbf16>
    %112 = vector.shape_cast %109 : vector<8x8xbf16> to vector<1x1x8x8xbf16>
    tpu.vector_store %arg18[%c0_52, %c0_53, %c0_54, %c0_55], %112 {strides = array<i32>} : memref<1x4x8x8xbf16, #tpu.memory_space<vmem>>, vector<1x1x8x8xbf16>,
    %113 = vector.extract_strided_slice %102 {offsets = [0, 0], sizes = [8, 4], strides = [1, 1]} : vector<8x16xf32> to vector<8x4xf32>
    %114 = vector.extract_strided_slice %105 {offsets = [0, 0], sizes = [8, 4], strides = [1, 1]} : vector<8x16xf32> to vector<8x4xf32>
    %115 = tpu.concatenate %113, %114 in 1 : vector<8x4xf32>, vector<8x4xf32> -> vector<8x8xf32>
    %116 = arith.truncf %115 : vector<8x8xf32> to vector<8x8xbf16>
    %c0_56 = arith.constant 0 : index
    %c0_57 = arith.constant 0 : index
    %c0_58 = arith.constant 0 : index
    %c0_59 = arith.constant 0 : index
    %117 = vector.load %arg19[%c0_56, %c0_57, %c0_58, %c0_59] : memref<1x4x8x8xbf16, #tpu.memory_space<vmem>>, vector<1x1x8x8xbf16>
    %118 = vector.shape_cast %117 : vector<1x1x8x8xbf16> to vector<8x8xbf16>
    %119 = vector.shape_cast %116 : vector<8x8xbf16> to vector<1x1x8x8xbf16>
    tpu.vector_store %arg19[%c0_56, %c0_57, %c0_58, %c0_59], %119 {strides = array<i32>} : memref<1x4x8x8xbf16, #tpu.memory_space<vmem>>, vector<1x1x8x8xbf16>,
    %120 = vector.extract_strided_slice %59 {offsets = [0, 0], sizes = [8, 8], strides = [1, 1]} : vector<8x32xf32> to vector<8x8xf32>
    %121 = arith.truncf %120 : vector<8x8xf32> to vector<8x8xbf16>
    %c0_60 = arith.constant 0 : index
    %c0_61 = arith.constant 0 : index
    %c0_62 = arith.constant 0 : index
    %c0_63 = arith.constant 0 : index
    %122 = vector.load %arg20[%c0_60, %c0_61, %c0_62, %c0_63] : memref<1x4x8x8xbf16, #tpu.memory_space<vmem>>, vector<1x1x8x8xbf16>
    %123 = vector.shape_cast %122 : vector<1x1x8x8xbf16> to vector<8x8xbf16>
    %124 = vector.shape_cast %121 : vector<8x8xbf16> to vector<1x1x8x8xbf16>
    tpu.vector_store %arg20[%c0_60, %c0_61, %c0_62, %c0_63], %124 {strides = array<i32>} : memref<1x4x8x8xbf16, #tpu.memory_space<vmem>>, vector<1x1x8x8xbf16>,
    %125 = vector.extract_strided_slice %96 {offsets = [0, 4], sizes = [8, 4], strides = [1, 1]} : vector<8x16xf32> to vector<8x4xf32>
    %126 = vector.extract_strided_slice %99 {offsets = [0, 4], sizes = [8, 4], strides = [1, 1]} : vector<8x16xf32> to vector<8x4xf32>
    %127 = tpu.concatenate %125, %126 in 1 : vector<8x4xf32>, vector<8x4xf32> -> vector<8x8xf32>
    %128 = arith.truncf %127 : vector<8x8xf32> to vector<8x8xbf16>
    %c0_64 = arith.constant 0 : index
    %c1 = arith.constant 1 : index
    %c0_65 = arith.constant 0 : index
    %c0_66 = arith.constant 0 : index
    %129 = vector.load %arg18[%c0_64, %c1, %c0_65, %c0_66] : memref<1x4x8x8xbf16, #tpu.memory_space<vmem>>, vector<1x1x8x8xbf16>
    %130 = vector.shape_cast %129 : vector<1x1x8x8xbf16> to vector<8x8xbf16>
    %131 = vector.shape_cast %128 : vector<8x8xbf16> to vector<1x1x8x8xbf16>
    tpu.vector_store %arg18[%c0_64, %c1, %c0_65, %c0_66], %131 {strides = array<i32>} : memref<1x4x8x8xbf16, #tpu.memory_space<vmem>>, vector<1x1x8x8xbf16>,
    %132 = vector.extract_strided_slice %102 {offsets = [0, 4], sizes = [8, 4], strides = [1, 1]} : vector<8x16xf32> to vector<8x4xf32>
    %133 = vector.extract_strided_slice %105 {offsets = [0, 4], sizes = [8, 4], strides = [1, 1]} : vector<8x16xf32> to vector<8x4xf32>
    %134 = tpu.concatenate %132, %133 in 1 : vector<8x4xf32>, vector<8x4xf32> -> vector<8x8xf32>
    %135 = arith.truncf %134 : vector<8x8xf32> to vector<8x8xbf16>
    %c0_67 = arith.constant 0 : index
    %c1_68 = arith.constant 1 : index
    %c0_69 = arith.constant 0 : index
    %c0_70 = arith.constant 0 : index
    %136 = vector.load %arg19[%c0_67, %c1_68, %c0_69, %c0_70] : memref<1x4x8x8xbf16, #tpu.memory_space<vmem>>, vector<1x1x8x8xbf16>
    %137 = vector.shape_cast %136 : vector<1x1x8x8xbf16> to vector<8x8xbf16>
    %138 = vector.shape_cast %135 : vector<8x8xbf16> to vector<1x1x8x8xbf16>
    tpu.vector_store %arg19[%c0_67, %c1_68, %c0_69, %c0_70], %138 {strides = array<i32>} : memref<1x4x8x8xbf16, #tpu.memory_space<vmem>>, vector<1x1x8x8xbf16>,
    %139 = vector.extract_strided_slice %59 {offsets = [0, 8], sizes = [8, 8], strides = [1, 1]} : vector<8x32xf32> to vector<8x8xf32>
    %140 = arith.truncf %139 : vector<8x8xf32> to vector<8x8xbf16>
    %c0_71 = arith.constant 0 : index
    %c1_72 = arith.constant 1 : index
    %c0_73 = arith.constant 0 : index
    %c0_74 = arith.constant 0 : index
    %141 = vector.load %arg20[%c0_71, %c1_72, %c0_73, %c0_74] : memref<1x4x8x8xbf16, #tpu.memory_space<vmem>>, vector<1x1x8x8xbf16>
    %142 = vector.shape_cast %141 : vector<1x1x8x8xbf16> to vector<8x8xbf16>
    %143 = vector.shape_cast %140 : vector<8x8xbf16> to vector<1x1x8x8xbf16>
    tpu.vector_store %arg20[%c0_71, %c1_72, %c0_73, %c0_74], %143 {strides = array<i32>} : memref<1x4x8x8xbf16, #tpu.memory_space<vmem>>, vector<1x1x8x8xbf16>,
    %144 = vector.extract_strided_slice %96 {offsets = [0, 8], sizes = [8, 4], strides = [1, 1]} : vector<8x16xf32> to vector<8x4xf32>
    %145 = vector.extract_strided_slice %99 {offsets = [0, 8], sizes = [8, 4], strides = [1, 1]} : vector<8x16xf32> to vector<8x4xf32>
    %146 = tpu.concatenate %144, %145 in 1 : vector<8x4xf32>, vector<8x4xf32> -> vector<8x8xf32>
    %147 = arith.truncf %146 : vector<8x8xf32> to vector<8x8xbf16>
    %c0_75 = arith.constant 0 : index
    %c2 = arith.constant 2 : index
    %c0_76 = arith.constant 0 : index
    %c0_77 = arith.constant 0 : index
    %148 = vector.load %arg18[%c0_75, %c2, %c0_76, %c0_77] : memref<1x4x8x8xbf16, #tpu.memory_space<vmem>>, vector<1x1x8x8xbf16>
    %149 = vector.shape_cast %148 : vector<1x1x8x8xbf16> to vector<8x8xbf16>
    %150 = vector.shape_cast %147 : vector<8x8xbf16> to vector<1x1x8x8xbf16>
    tpu.vector_store %arg18[%c0_75, %c2, %c0_76, %c0_77], %150 {strides = array<i32>} : memref<1x4x8x8xbf16, #tpu.memory_space<vmem>>, vector<1x1x8x8xbf16>,
    %151 = vector.extract_strided_slice %102 {offsets = [0, 8], sizes = [8, 4], strides = [1, 1]} : vector<8x16xf32> to vector<8x4xf32>
    %152 = vector.extract_strided_slice %105 {offsets = [0, 8], sizes = [8, 4], strides = [1, 1]} : vector<8x16xf32> to vector<8x4xf32>
    %153 = tpu.concatenate %151, %152 in 1 : vector<8x4xf32>, vector<8x4xf32> -> vector<8x8xf32>
    %154 = arith.truncf %153 : vector<8x8xf32> to vector<8x8xbf16>
    %c0_78 = arith.constant 0 : index
    %c2_79 = arith.constant 2 : index
    %c0_80 = arith.constant 0 : index
    %c0_81 = arith.constant 0 : index
    %155 = vector.load %arg19[%c0_78, %c2_79, %c0_80, %c0_81] : memref<1x4x8x8xbf16, #tpu.memory_space<vmem>>, vector<1x1x8x8xbf16>
    %156 = vector.shape_cast %155 : vector<1x1x8x8xbf16> to vector<8x8xbf16>
    %157 = vector.shape_cast %154 : vector<8x8xbf16> to vector<1x1x8x8xbf16>
    tpu.vector_store %arg19[%c0_78, %c2_79, %c0_80, %c0_81], %157 {strides = array<i32>} : memref<1x4x8x8xbf16, #tpu.memory_space<vmem>>, vector<1x1x8x8xbf16>,
    %158 = vector.extract_strided_slice %59 {offsets = [0, 16], sizes = [8, 8], strides = [1, 1]} : vector<8x32xf32> to vector<8x8xf32>
    %159 = arith.truncf %158 : vector<8x8xf32> to vector<8x8xbf16>
    %c0_82 = arith.constant 0 : index
    %c2_83 = arith.constant 2 : index
    %c0_84 = arith.constant 0 : index
    %c0_85 = arith.constant 0 : index
    %160 = vector.load %arg20[%c0_82, %c2_83, %c0_84, %c0_85] : memref<1x4x8x8xbf16, #tpu.memory_space<vmem>>, vector<1x1x8x8xbf16>
    %161 = vector.shape_cast %160 : vector<1x1x8x8xbf16> to vector<8x8xbf16>
    %162 = vector.shape_cast %159 : vector<8x8xbf16> to vector<1x1x8x8xbf16>
    tpu.vector_store %arg20[%c0_82, %c2_83, %c0_84, %c0_85], %162 {strides = array<i32>} : memref<1x4x8x8xbf16, #tpu.memory_space<vmem>>, vector<1x1x8x8xbf16>,
    %163 = vector.extract_strided_slice %96 {offsets = [0, 12], sizes = [8, 4], strides = [1, 1]} : vector<8x16xf32> to vector<8x4xf32>
    %164 = vector.extract_strided_slice %99 {offsets = [0, 12], sizes = [8, 4], strides = [1, 1]} : vector<8x16xf32> to vector<8x4xf32>
    %165 = tpu.concatenate %163, %164 in 1 : vector<8x4xf32>, vector<8x4xf32> -> vector<8x8xf32>
    %166 = arith.truncf %165 : vector<8x8xf32> to vector<8x8xbf16>
    %c0_86 = arith.constant 0 : index
    %c3 = arith.constant 3 : index
    %c0_87 = arith.constant 0 : index
    %c0_88 = arith.constant 0 : index
    %167 = vector.load %arg18[%c0_86, %c3, %c0_87, %c0_88] : memref<1x4x8x8xbf16, #tpu.memory_space<vmem>>, vector<1x1x8x8xbf16>
    %168 = vector.shape_cast %167 : vector<1x1x8x8xbf16> to vector<8x8xbf16>
    %169 = vector.shape_cast %166 : vector<8x8xbf16> to vector<1x1x8x8xbf16>
    tpu.vector_store %arg18[%c0_86, %c3, %c0_87, %c0_88], %169 {strides = array<i32>} : memref<1x4x8x8xbf16, #tpu.memory_space<vmem>>, vector<1x1x8x8xbf16>,
    %170 = vector.extract_strided_slice %102 {offsets = [0, 12], sizes = [8, 4], strides = [1, 1]} : vector<8x16xf32> to vector<8x4xf32>
    %171 = vector.extract_strided_slice %105 {offsets = [0, 12], sizes = [8, 4], strides = [1, 1]} : vector<8x16xf32> to vector<8x4xf32>
    %172 = tpu.concatenate %170, %171 in 1 : vector<8x4xf32>, vector<8x4xf32> -> vector<8x8xf32>
    %173 = arith.truncf %172 : vector<8x8xf32> to vector<8x8xbf16>
    %c0_89 = arith.constant 0 : index
    %c3_90 = arith.constant 3 : index
    %c0_91 = arith.constant 0 : index
    %c0_92 = arith.constant 0 : index
    %174 = vector.load %arg19[%c0_89, %c3_90, %c0_91, %c0_92] : memref<1x4x8x8xbf16, #tpu.memory_space<vmem>>, vector<1x1x8x8xbf16>
    %175 = vector.shape_cast %174 : vector<1x1x8x8xbf16> to vector<8x8xbf16>
    %176 = vector.shape_cast %173 : vector<8x8xbf16> to vector<1x1x8x8xbf16>
    tpu.vector_store %arg19[%c0_89, %c3_90, %c0_91, %c0_92], %176 {strides = array<i32>} : memref<1x4x8x8xbf16, #tpu.memory_space<vmem>>, vector<1x1x8x8xbf16>,
    %177 = vector.extract_strided_slice %59 {offsets = [0, 24], sizes = [8, 8], strides = [1, 1]} : vector<8x32xf32> to vector<8x8xf32>
    %178 = arith.truncf %177 : vector<8x8xf32> to vector<8x8xbf16>
    %c0_93 = arith.constant 0 : index
    %c3_94 = arith.constant 3 : index
    %c0_95 = arith.constant 0 : index
    %c0_96 = arith.constant 0 : index
    %179 = vector.load %arg20[%c0_93, %c3_94, %c0_95, %c0_96] : memref<1x4x8x8xbf16, #tpu.memory_space<vmem>>, vector<1x1x8x8xbf16>
    %180 = vector.shape_cast %179 : vector<1x1x8x8xbf16> to vector<8x8xbf16>
    %181 = vector.shape_cast %178 : vector<8x8xbf16> to vector<1x1x8x8xbf16>
    tpu.vector_store %arg20[%c0_93, %c3_94, %c0_95, %c0_96], %181 {strides = array<i32>} : memref<1x4x8x8xbf16, #tpu.memory_space<vmem>>, vector<1x1x8x8xbf16>,
    return
  }
  func.func @transform_0(%arg0: i32, %arg1: i32) -> (i32, i32, i32) {
    %c0_i32 = arith.constant 0 : i32
    %c0_i32_0 = arith.constant 0 : i32
    return %arg0, %arg1, %c0_i32 : i32, i32, i32
  }
  func.func @transform_1(%arg0: i32, %arg1: i32) -> (i32, i32, i32) {
    %c0_i32 = arith.constant 0 : i32
    %c0_i32_0 = arith.constant 0 : i32
    %c0_i32_1 = arith.constant 0 : i32
    return %arg0, %c0_i32, %c0_i32_0 : i32, i32, i32
  }
  func.func @transform_2(%arg0: i32, %arg1: i32) -> (i32, i32) {
    %c0_i32 = arith.constant 0 : i32
    %c0_i32_0 = arith.constant 0 : i32
    %c0_i32_1 = arith.constant 0 : i32
    return %c0_i32, %c0_i32_0 : i32, i32
  }
  func.func @transform_3(%arg0: i32, %arg1: i32) -> (i32, i32) {
    %c0_i32 = arith.constant 0 : i32
    %c0_i32_0 = arith.constant 0 : i32
    %c0_i32_1 = arith.constant 0 : i32
    return %c0_i32, %c0_i32_0 : i32, i32
  }
  func.func @transform_4(%arg0: i32, %arg1: i32) -> (i32, i32) {
    %c0_i32 = arith.constant 0 : i32
    %c0_i32_0 = arith.constant 0 : i32
    %c0_i32_1 = arith.constant 0 : i32
    return %c0_i32, %c0_i32_0 : i32, i32
  }
  func.func @transform_5(%arg0: i32, %arg1: i32) -> (i32, i32) {
    %c0_i32 = arith.constant 0 : i32
    %c0_i32_0 = arith.constant 0 : i32
    %c0_i32_1 = arith.constant 0 : i32
    return %c0_i32, %c0_i32_0 : i32, i32
  }
  func.func @transform_6(%arg0: i32, %arg1: i32) -> (i32, i32) {
    %c0_i32 = arith.constant 0 : i32
    %c0_i32_0 = arith.constant 0 : i32
    %c0_i32_1 = arith.constant 0 : i32
    return %c0_i32, %c0_i32_0 : i32, i32
  }
  func.func @transform_7(%arg0: i32, %arg1: i32) -> (i32, i32) {
    %c0_i32 = arith.constant 0 : i32
    %c0_i32_0 = arith.constant 0 : i32
    %c0_i32_1 = arith.constant 0 : i32
    return %c0_i32, %c0_i32_0 : i32, i32
  }
  func.func @transform_8(%arg0: i32, %arg1: i32) -> (i32, i32) {
    %c0_i32 = arith.constant 0 : i32
    %c0_i32_0 = arith.constant 0 : i32
    %c0_i32_1 = arith.constant 0 : i32
    return %c0_i32, %c0_i32_0 : i32, i32
  }
  func.func @transform_9(%arg0: i32, %arg1: i32) -> (i32, i32) {
    %c0_i32 = arith.constant 0 : i32
    %c0_i32_0 = arith.constant 0 : i32
    %c0_i32_1 = arith.constant 0 : i32
    return %c0_i32, %c0_i32_0 : i32, i32
  }
  func.func @transform_10(%arg0: i32, %arg1: i32) -> (i32, i32) {
    %c0_i32 = arith.constant 0 : i32
    %c0_i32_0 = arith.constant 0 : i32
    %c0_i32_1 = arith.constant 0 : i32
    return %c0_i32, %c0_i32_0 : i32, i32
  }
  func.func @transform_11(%arg0: i32, %arg1: i32) -> (i32, i32) {
    %c0_i32 = arith.constant 0 : i32
    %c0_i32_0 = arith.constant 0 : i32
    %c0_i32_1 = arith.constant 0 : i32
    return %c0_i32, %c0_i32_0 : i32, i32
  }
  func.func @transform_12(%arg0: i32, %arg1: i32) -> (i32, i32) {
    %c0_i32 = arith.constant 0 : i32
    %c0_i32_0 = arith.constant 0 : i32
    return %arg1, %c0_i32 : i32, i32
  }
  func.func @transform_13(%arg0: i32, %arg1: i32) -> (i32, i32) {
    %c0_i32 = arith.constant 0 : i32
    %c0_i32_0 = arith.constant 0 : i32
    return %arg1, %c0_i32 : i32, i32
  }
  func.func @transform_14(%arg0: i32, %arg1: i32) -> (i32, i32) {
    %c0_i32 = arith.constant 0 : i32
    %c0_i32_0 = arith.constant 0 : i32
    return %arg1, %c0_i32 : i32, i32
  }
  func.func @transform_15(%arg0: i32, %arg1: i32) -> (i32, i32) {
    %c0_i32 = arith.constant 0 : i32
    %c0_i32_0 = arith.constant 0 : i32
    return %arg1, %c0_i32 : i32, i32
  }
  func.func @transform_16(%arg0: i32, %arg1: i32) -> (i32, i32, i32, i32) {
    %c0_i32 = arith.constant 0 : i32
    %c0_i32_0 = arith.constant 0 : i32
    %c0_i32_1 = arith.constant 0 : i32
    return %arg0, %c0_i32, %arg1, %c0_i32_0 : i32, i32, i32, i32
  }
  func.func @transform_17(%arg0: i32, %arg1: i32) -> (i32, i32, i32, i32) {
    %c0_i32 = arith.constant 0 : i32
    %c0_i32_0 = arith.constant 0 : i32
    %c0_i32_1 = arith.constant 0 : i32
    return %arg0, %c0_i32, %arg1, %c0_i32_0 : i32, i32, i32, i32
  }
  func.func @transform_18(%arg0: i32, %arg1: i32) -> (i32, i32, i32, i32) {
    %c0_i32 = arith.constant 0 : i32
    %c0_i32_0 = arith.constant 0 : i32
    %c0_i32_1 = arith.constant 0 : i32
    return %arg0, %c0_i32, %arg1, %c0_i32_0 : i32, i32, i32, i32
  }
  func.func @transform_19(%arg0: i32, %arg1: i32) -> (i32, i32, i32) {
    %c0_i32 = arith.constant 0 : i32
    %c0_i32_0 = arith.constant 0 : i32
    %c0_i32_1 = arith.constant 0 : i32
    return %arg0, %c0_i32, %c0_i32_0 : i32, i32, i32
  }
}

</mosaic_0001>

<llo_original>
// kernel: tpu_custom_call.1
$region0: #{tpu_custom_call.1}
  #allocation0 [shape = 'u32[]', space=smem, size = 0x4, offset = 0x4, fixed_abs, tag = 'smem constant byte address 0x4 - core index']
  #allocation1 [shape = 'u32[144,128]{1,0:T(1,128)}', space=vmem, size = 0x12000, scoped, tag = 'internal scratch']
  %s0 = inlined_call_operand.hbm [shape: f32[2,8,32], index: 0, kind: input, shape index: {}]
  %s1 = inlined_call_operand.hbm [shape: f32[2,1,32], index: 1, kind: input, shape index: {}]
  %s2 = inlined_call_operand.hbm [shape: bf16[32,192], index: 2, kind: input, shape index: {}]
  %s3 = inlined_call_operand.hbm [shape: f32[1,192], index: 3, kind: input, shape index: {}]
  %s4 = inlined_call_operand.hbm [shape: bf16[32,32], index: 4, kind: input, shape index: {}]
  %s5 = inlined_call_operand.vmem [shape: f32[1,32], index: 5, kind: input, shape index: {}]
  %s6 = inlined_call_operand.vmem [shape: bf16[32,32], index: 6, kind: input, shape index: {}]
  %s7 = inlined_call_operand.hbm [shape: f32[1,32], index: 7, kind: input, shape index: {}]
  %s8 = inlined_call_operand.hbm [shape: bf16[32,32], index: 8, kind: input, shape index: {}]
  %s9 = inlined_call_operand.hbm [shape: f32[1,32], index: 9, kind: input, shape index: {}]
  %s10 = inlined_call_operand.hbm [shape: f32[1,32], index: 10, kind: input, shape index: {}]
  %s11 = inlined_call_operand.hbm [shape: f32[1,32], index: 11, kind: input, shape index: {}]
  %s12 = inlined_call_operand.vmem [shape: f32[8,16], index: 12, kind: input, shape index: {}]
  %s13 = inlined_call_operand.vmem [shape: f32[8,16], index: 13, kind: input, shape index: {}]
  %s14 = inlined_call_operand.vmem [shape: f32[8,16], index: 14, kind: input, shape index: {}]
  %s15 = inlined_call_operand.vmem [shape: f32[8,16], index: 15, kind: input, shape index: {}]
  %s16 = inlined_call_operand.hbm [shape: bf16[2,4,8,8], index: 16, kind: output, shape index: {0}]
  %s17 = inlined_call_operand.hbm [shape: bf16[2,4,8,8], index: 17, kind: output, shape index: {1}]
  %s18 = inlined_call_operand.hbm [shape: bf16[2,4,8,8], index: 18, kind: output, shape index: {2}]
  %s19 = inlined_call_operand.hbm [shape: f32[2,1,192], index: 19, kind: output, shape index: {3}]
  %20 = xla_tuple %s16, %s17, %s18, %s19
  %s21 = sld [smem:[#allocation0]]
  $region161: #{tpu_custom_call.1} parent=0
    _
  %s23 = ssub.s32 1, %s21
  %s24 = scalar_select 0, %s23, %s21
  $region1: #{tpu_custom_call.1} parent=0
    #allocation2 [shape = 'u8[8192]{0}', space=vmem, size = 0x2000, scoped, tag = 'input window, operand 0']
    #allocation3 [shape = 's32[2]{0}', space=sflag, size = 0x8, scoped, tag = 'scoped memory for tpu_custom_call.1']
    #allocation4 [shape = 's32[2]{0}', space=sflag, size = 0x8, scoped, tag = 'scoped memory for tpu_custom_call.1']
    #allocation5 [shape = 'u8[1024]{0}', space=vmem, size = 0x400, scoped, tag = 'input window, operand 1']
    #allocation6 [shape = 's32[2]{0}', space=sflag, size = 0x8, scoped, tag = 'scoped memory for tpu_custom_call.1']
    #allocation7 [shape = 'u8[16384]{0}', space=vmem, size = 0x4000, scoped, tag = 'input window, operand 2, single buffered']
    #allocation8 [shape = 'u8[1024]{0}', space=vmem, size = 0x400, scoped, tag = 'input window, operand 3, single buffered']
    #allocation9 [shape = 's32[1]{0}', space=sflag, size = 0x4, scoped, tag = 'scoped memory for tpu_custom_call.1']
    #allocation10 [shape = 'u8[8192]{0}', space=vmem, size = 0x2000, scoped, tag = 'input window, operand 4, single buffered']
    #allocation11 [shape = 'u8[512]{0}', space=vmem, size = 0x400, scoped, tag = 'input window, operand 7, single buffered']
    #allocation12 [shape = 's32[1]{0}', space=sflag, size = 0x4, scoped, tag = 'scoped memory for tpu_custom_call.1']
    #allocation13 [shape = 'u8[8192]{0}', space=vmem, size = 0x2000, scoped, tag = 'input window, operand 8, single buffered']
    #allocation14 [shape = 'u8[512]{0}', space=vmem, size = 0x400, scoped, tag = 'input window, operand 9, single buffered']
    #allocation15 [shape = 's32[1]{0}', space=sflag, size = 0x4, scoped, tag = 'scoped memory for tpu_custom_call.1']
    #allocation16 [shape = 'u8[512]{0}', space=vmem, size = 0x400, scoped, tag = 'input window, operand 10, single buffered']
    #allocation17 [shape = 'u8[512]{0}', space=vmem, size = 0x400, scoped, tag = 'input window, operand 11, single buffered']
    #allocation18 [shape = 's32[1]{0}', space=sflag, size = 0x4, scoped, tag = 'scoped memory for tpu_custom_call.1']
    #allocation19 [shape = 'u8[16384]{0}', space=vmem, size = 0x4000, scoped, tag = 'output window, operand 0']
    #allocation20 [shape = 'u8[16384]{0}', space=vmem, size = 0x4000, scoped, tag = 'output window, operand 1']
    #allocation21 [shape = 's32[2]{0}', space=sflag, size = 0x8, scoped, tag = 'scoped memory for tpu_custom_call.1']
    #allocation22 [shape = 'u8[16384]{0}', space=vmem, size = 0x4000, scoped, tag = 'output window, operand 2']
    #allocation23 [shape = 'u8[2048]{0}', space=vmem, size = 0x800, scoped, tag = 'output window, operand 3']
    #allocation24 [shape = 's32[2]{0}', space=sflag, size = 0x8, scoped, tag = 'scoped memory for tpu_custom_call.1']
    %25 = vsyncpa [#allocation3], 0
    %s26 = scalar_lea.sflag [#allocation3], 1
    %27 = vsyncpa %s26, 0
    %28 = vsyncpa [#allocation6], 0
    %s29 = scalar_lea.sflag [#allocation6], 1
    %30 = vsyncpa %s29, 0
    %31 = vsyncpa [#allocation9], 0
    %32 = vsyncpa [#allocation12], 0
    %33 = vsyncpa [#allocation15], 0
    %34 = vsyncpa [#allocation18], 0
    %35 = vsyncpa [#allocation4], 0
    %s36 = scalar_lea.sflag [#allocation4], 1
    %37 = vsyncpa %s36, 0
    %38 = vsyncpa [#allocation21], 0
    %s39 = scalar_lea.sflag [#allocation21], 1
    %40 = vsyncpa %s39, 0
    %41 = vsyncpa [#allocation24], 0
    %s42 = scalar_lea.sflag [#allocation24], 1
    %43 = vsyncpa %s42, 0
    loop: start=0, step=1, limit=4
    $region2: #{tpu_custom_call.1} parent=1 // loop_pre_header
      _
    $region3: #{tpu_custom_call.1} parent=1 // loop_header
      %s45 = sphi 0, %s49
      %p46 = scmp.ge.s32.totalorder %s45, 4
      %s52 = sphi 0, %s64
      %s53 = sphi 0, %s60
      %s54 = sphi 0, %s52
      %s55 = sphi 0, %s53
      %s56 = sphi 0, %s54
      %s57 = sphi 0, %s55
      %s69 = sphi 0, %s71
      %s72 = sphi 0, %s69
      %s73 = sphi 0, %s72
      %s89 = sphi 0, %s73
      %s95 = sphi 0, %s97
      %s98 = sphi 0, %s95
      %s99 = sphi 0, %s98
      %s115 = sphi 0, %s99
      %s119 = sphi 0, %s119
      %s121 = sphi 0, %s119
      %s122 = sphi 0, %s121
      %s136 = sphi 0, %s122
      %s140 = sphi 0, %s140
      %s142 = sphi 0, %s140
      %s143 = sphi 0, %s142
      %s157 = sphi 0, %s143
      %s161 = sphi 0, %s161
      %s163 = sphi 0, %s161
      %s164 = sphi 0, %s163
      %s178 = sphi 0, %s164
      %s182 = sphi 0, %s182
      %s184 = sphi 0, %s182
      %s185 = sphi 0, %s184
      %s199 = sphi 0, %s185
      %s203 = sphi 0, %s203
      %s205 = sphi 0, %s203
      %s206 = sphi 0, %s205
      %s220 = sphi 0, %s206
      %s224 = sphi 0, %s224
      %s226 = sphi 0, %s224
      %s227 = sphi 0, %s226
      %s241 = sphi 0, %s227
      %s245 = sphi 0, %s245
      %s247 = sphi 0, %s245
      %s248 = sphi 0, %s247
      %s262 = sphi 0, %s248
      %s266 = sphi 0, %s266
      %s268 = sphi 0, %s266
      %s269 = sphi 0, %s268
      %s283 = sphi 0, %s269
      %s287 = sphi 0, %s287
      %s289 = sphi 0, %s287
      %s290 = sphi 0, %s289
      %s304 = sphi 0, %s290
      %s308 = sphi 0, %s308
      %s310 = sphi 0, %s308
      %s311 = sphi 0, %s310
      %s325 = sphi 0, %s311
      %s331 = sphi 0, %s333
      %s334 = sphi 0, %s331
      %s335 = sphi 0, %s334
      %s351 = sphi 0, %s335
      %s357 = sphi 0, %s359
      %s360 = sphi 0, %s357
      %s361 = sphi 0, %s360
      %s377 = sphi 0, %s361
      %s383 = sphi 0, %s385
      %s386 = sphi 0, %s383
      %s387 = sphi 0, %s386
      %s403 = sphi 0, %s387
      %s409 = sphi 0, %s411
      %s412 = sphi 0, %s409
      %s413 = sphi 0, %s412
      %s429 = sphi 0, %s413
      %s437 = sphi 0, %s439
      %s440 = sphi 0, %s437
      %s441 = sphi 0, %s440
      %s457 = sphi 0, %s441
      %s465 = sphi 0, %s467
      %s468 = sphi 0, %s465
      %s469 = sphi 0, %s468
      %s485 = sphi 0, %s469
      %s493 = sphi 0, %s495
      %s496 = sphi 0, %s493
      %s497 = sphi 0, %s496
      %s513 = sphi 0, %s497
      %s519 = sphi 0, %s521
      %s522 = sphi 0, %s519
      %s523 = sphi 0, %s522
      %s539 = sphi 0, %s523
    $region4: #{tpu_custom_call.1} parent=1 // loop_header_branch
      %48 = sbr.rel (%p46) target = $region8
    $region5: #{tpu_custom_call.1} parent=1 // loop_body
      %s50 = ssub.s32 %s45, 1
      %s51 = ssub.s32 %s45, 2
      %s58 = sadd.s32 1, %s53
      %p59 = scmp.ge.s32.totalorder %s58, 1
      %s60 = scalar_select %p59, 0, %s58
      %s61 = sadd.s32 1, %s52
      %s62 = scalar_select %p59, %s61, %s52
      %p63 = scmp.ge.s32.totalorder %s62, 2
      %s64 = scalar_select %p63, 0, %s62
      %s65 = ssub.s32 %s52, %s64
      %s66 = ssub.s32 %s53, %s60
      %s67 = sor.u32 %s65, %s66
      %p68 = scmp.eq.s32.totalorder %s67, 0
      %s70 = sadd.s32 %s69, 1
      %s71 = scalar_select %p68, %s69, %s70
      %p74 = pneg %p68
      %p75 = scmp.eq.s32.totalorder %s45, 1
      %p76 = por %p74, %p75
      %p77 = scmp.ne.s32.totalorder %s69, %s72
      %p78 = scmp.eq.s32.totalorder %s45, 0
      %p79 = por %p77, %p78
      %p80 = scmp.ne.s32.totalorder %s69, %s72
      %p81 = scmp.eq.s32.totalorder %s50, 1
      %p82 = por %p80, %p81
      %p83 = scmp.ne.s32.totalorder %s72, %s73
      %p84 = scmp.eq.s32.totalorder %s50, 0
      %p85 = por %p83, %p84
      %p86 = scmp.ne.s32.totalorder %s72, %s73
      %p87 = scmp.eq.s32.totalorder %s51, 1
      %p88 = por %p86, %p87
      %p90 = scmp.ne.s32.totalorder %s73, %s89
      %p91 = scmp.eq.s32.totalorder %s51, 0
      %p92 = por %p90, %p91
      %s93 = ssub.s32 %s52, %s64
      %p94 = scmp.eq.s32.totalorder %s93, 0
      %s96 = sadd.s32 %s95, 1
      %s97 = scalar_select %p94, %s95, %s96
      %p100 = pneg %p94
      %p101 = scmp.eq.s32.totalorder %s45, 1
      %p102 = por %p100, %p101
      %p103 = scmp.ne.s32.totalorder %s95, %s98
      %p104 = scmp.eq.s32.totalorder %s45, 0
      %p105 = por %p103, %p104
      %p106 = scmp.ne.s32.totalorder %s95, %s98
      %p107 = scmp.eq.s32.totalorder %s50, 1
      %p108 = por %p106, %p107
      %p109 = scmp.ne.s32.totalorder %s98, %s99
      %p110 = scmp.eq.s32.totalorder %s50, 0
      %p111 = por %p109, %p110
      %p112 = scmp.ne.s32.totalorder %s98, %s99
      %p113 = scmp.eq.s32.totalorder %s51, 1
      %p114 = por %p112, %p113
      %p116 = scmp.ne.s32.totalorder %s99, %s115
      %p117 = scmp.eq.s32.totalorder %s51, 0
      %p118 = por %p116, %p117
      %s120 = sadd.s32 %s119, 1
      %p123 = scmp.eq.s32.totalorder %s45, 1
      %p124 = scmp.ne.s32.totalorder %s119, %s121
      %p125 = scmp.eq.s32.totalorder %s45, 0
      %p126 = por %p124, %p125
      %p127 = scmp.ne.s32.totalorder %s119, %s121
      %p128 = scmp.eq.s32.totalorder %s50, 1
      %p129 = por %p127, %p128
      %p130 = scmp.ne.s32.totalorder %s121, %s122
      %p131 = scmp.eq.s32.totalorder %s50, 0
      %p132 = por %p130, %p131
      %p133 = scmp.ne.s32.totalorder %s121, %s122
      %p134 = scmp.eq.s32.totalorder %s51, 1
      %p135 = por %p133, %p134
      %p137 = scmp.ne.s32.totalorder %s122, %s136
      %p138 = scmp.eq.s32.totalorder %s51, 0
      %p139 = por %p137, %p138
      %s141 = sadd.s32 %s140, 1
      %p144 = scmp.eq.s32.totalorder %s45, 1
      %p145 = scmp.ne.s32.totalorder %s140, %s142
      %p146 = scmp.eq.s32.totalorder %s45, 0
      %p147 = por %p145, %p146
      %p148 = scmp.ne.s32.totalorder %s140, %s142
      %p149 = scmp.eq.s32.totalorder %s50, 1
      %p150 = por %p148, %p149
      %p151 = scmp.ne.s32.totalorder %s142, %s143
      %p152 = scmp.eq.s32.totalorder %s50, 0
      %p153 = por %p151, %p152
      %p154 = scmp.ne.s32.totalorder %s142, %s143
      %p155 = scmp.eq.s32.totalorder %s51, 1
      %p156 = por %p154, %p155
      %p158 = scmp.ne.s32.totalorder %s143, %s157
      %p159 = scmp.eq.s32.totalorder %s51, 0
      %p160 = por %p158, %p159
      %s162 = sadd.s32 %s161, 1
      %p165 = scmp.eq.s32.totalorder %s45, 1
      %p166 = scmp.ne.s32.totalorder %s161, %s163
      %p167 = scmp.eq.s32.totalorder %s45, 0
      %p168 = por %p166, %p167
      %p169 = scmp.ne.s32.totalorder %s161, %s163
      %p170 = scmp.eq.s32.totalorder %s50, 1
      %p171 = por %p169, %p170
      %p172 = scmp.ne.s32.totalorder %s163, %s164
      %p173 = scmp.eq.s32.totalorder %s50, 0
      %p174 = por %p172, %p173
      %p175 = scmp.ne.s32.totalorder %s163, %s164
      %p176 = scmp.eq.s32.totalorder %s51, 1
      %p177 = por %p175, %p176
      %p179 = scmp.ne.s32.totalorder %s164, %s178
      %p180 = scmp.eq.s32.totalorder %s51, 0
      %p181 = por %p179, %p180
      %s183 = sadd.s32 %s182, 1
      %p186 = scmp.eq.s32.totalorder %s45, 1
      %p187 = scmp.ne.s32.totalorder %s182, %s184
      %p188 = scmp.eq.s32.totalorder %s45, 0
      %p189 = por %p187, %p188
      %p190 = scmp.ne.s32.totalorder %s182, %s184
      %p191 = scmp.eq.s32.totalorder %s50, 1
      %p192 = por %p190, %p191
      %p193 = scmp.ne.s32.totalorder %s184, %s185
      %p194 = scmp.eq.s32.totalorder %s50, 0
      %p195 = por %p193, %p194
      %p196 = scmp.ne.s32.totalorder %s184, %s185
      %p197 = scmp.eq.s32.totalorder %s51, 1
      %p198 = por %p196, %p197
      %p200 = scmp.ne.s32.totalorder %s185, %s199
      %p201 = scmp.eq.s32.totalorder %s51, 0
      %p202 = por %p200, %p201
      %s204 = sadd.s32 %s203, 1
      %p207 = scmp.eq.s32.totalorder %s45, 1
      %p208 = scmp.ne.s32.totalorder %s203, %s205
      %p209 = scmp.eq.s32.totalorder %s45, 0
      %p210 = por %p208, %p209
      %p211 = scmp.ne.s32.totalorder %s203, %s205
      %p212 = scmp.eq.s32.totalorder %s50, 1
      %p213 = por %p211, %p212
      %p214 = scmp.ne.s32.totalorder %s205, %s206
      %p215 = scmp.eq.s32.totalorder %s50, 0
      %p216 = por %p214, %p215
      %p217 = scmp.ne.s32.totalorder %s205, %s206
      %p218 = scmp.eq.s32.totalorder %s51, 1
      %p219 = por %p217, %p218
      %p221 = scmp.ne.s32.totalorder %s206, %s220
      %p222 = scmp.eq.s32.totalorder %s51, 0
      %p223 = por %p221, %p222
      %s225 = sadd.s32 %s224, 1
      %p228 = scmp.eq.s32.totalorder %s45, 1
      %p229 = scmp.ne.s32.totalorder %s224, %s226
      %p230 = scmp.eq.s32.totalorder %s45, 0
      %p231 = por %p229, %p230
      %p232 = scmp.ne.s32.totalorder %s224, %s226
      %p233 = scmp.eq.s32.totalorder %s50, 1
      %p234 = por %p232, %p233
      %p235 = scmp.ne.s32.totalorder %s226, %s227
      %p236 = scmp.eq.s32.totalorder %s50, 0
      %p237 = por %p235, %p236
      %p238 = scmp.ne.s32.totalorder %s226, %s227
      %p239 = scmp.eq.s32.totalorder %s51, 1
      %p240 = por %p238, %p239
      %p242 = scmp.ne.s32.totalorder %s227, %s241
      %p243 = scmp.eq.s32.totalorder %s51, 0
      %p244 = por %p242, %p243
      %s246 = sadd.s32 %s245, 1
      %p249 = scmp.eq.s32.totalorder %s45, 1
      %p250 = scmp.ne.s32.totalorder %s245, %s247
      %p251 = scmp.eq.s32.totalorder %s45, 0
      %p252 = por %p250, %p251
      %p253 = scmp.ne.s32.totalorder %s245, %s247
      %p254 = scmp.eq.s32.totalorder %s50, 1
      %p255 = por %p253, %p254
      %p256 = scmp.ne.s32.totalorder %s247, %s248
      %p257 = scmp.eq.s32.totalorder %s50, 0
      %p258 = por %p256, %p257
      %p259 = scmp.ne.s32.totalorder %s247, %s248
      %p260 = scmp.eq.s32.totalorder %s51, 1
      %p261 = por %p259, %p260
      %p263 = scmp.ne.s32.totalorder %s248, %s262
      %p264 = scmp.eq.s32.totalorder %s51, 0
      %p265 = por %p263, %p264
      %s267 = sadd.s32 %s266, 1
      %p270 = scmp.eq.s32.totalorder %s45, 1
      %p271 = scmp.ne.s32.totalorder %s266, %s268
      %p272 = scmp.eq.s32.totalorder %s45, 0
      %p273 = por %p271, %p272
      %p274 = scmp.ne.s32.totalorder %s266, %s268
      %p275 = scmp.eq.s32.totalorder %s50, 1
      %p276 = por %p274, %p275
      %p277 = scmp.ne.s32.totalorder %s268, %s269
      %p278 = scmp.eq.s32.totalorder %s50, 0
      %p279 = por %p277, %p278
      %p280 = scmp.ne.s32.totalorder %s268, %s269
      %p281 = scmp.eq.s32.totalorder %s51, 1
      %p282 = por %p280, %p281
      %p284 = scmp.ne.s32.totalorder %s269, %s283
      %p285 = scmp.eq.s32.totalorder %s51, 0
      %p286 = por %p284, %p285
      %s288 = sadd.s32 %s287, 1
      %p291 = scmp.eq.s32.totalorder %s45, 1
      %p292 = scmp.ne.s32.totalorder %s287, %s289
      %p293 = scmp.eq.s32.totalorder %s45, 0
      %p294 = por %p292, %p293
      %p295 = scmp.ne.s32.totalorder %s287, %s289
      %p296 = scmp.eq.s32.totalorder %s50, 1
      %p297 = por %p295, %p296
      %p298 = scmp.ne.s32.totalorder %s289, %s290
      %p299 = scmp.eq.s32.totalorder %s50, 0
      %p300 = por %p298, %p299
      %p301 = scmp.ne.s32.totalorder %s289, %s290
      %p302 = scmp.eq.s32.totalorder %s51, 1
      %p303 = por %p301, %p302
      %p305 = scmp.ne.s32.totalorder %s290, %s304
      %p306 = scmp.eq.s32.totalorder %s51, 0
      %p307 = por %p305, %p306
      %s309 = sadd.s32 %s308, 1
      %p312 = scmp.eq.s32.totalorder %s45, 1
      %p313 = scmp.ne.s32.totalorder %s308, %s310
      %p314 = scmp.eq.s32.totalorder %s45, 0
      %p315 = por %p313, %p314
      %p316 = scmp.ne.s32.totalorder %s308, %s310
      %p317 = scmp.eq.s32.totalorder %s50, 1
      %p318 = por %p316, %p317
      %p319 = scmp.ne.s32.totalorder %s310, %s311
      %p320 = scmp.eq.s32.totalorder %s50, 0
      %p321 = por %p319, %p320
      %p322 = scmp.ne.s32.totalorder %s310, %s311
      %p323 = scmp.eq.s32.totalorder %s51, 1
      %p324 = por %p322, %p323
      %p326 = scmp.ne.s32.totalorder %s311, %s325
      %p327 = scmp.eq.s32.totalorder %s51, 0
      %p328 = por %p326, %p327
      %s329 = ssub.s32 %s53, %s60
      %p330 = scmp.eq.s32.totalorder %s329, 0
      %s332 = sadd.s32 %s331, 1
      %s333 = scalar_select %p330, %s331, %s332
      %p336 = pneg %p330
      %p337 = scmp.eq.s32.totalorder %s45, 1
      %p338 = por %p336, %p337
      %p339 = scmp.ne.s32.totalorder %s331, %s334
      %p340 = scmp.eq.s32.totalorder %s45, 0
      %p341 = por %p339, %p340
      %p342 = scmp.ne.s32.totalorder %s331, %s334
      %p343 = scmp.eq.s32.totalorder %s50, 1
      %p344 = por %p342, %p343
      %p345 = scmp.ne.s32.totalorder %s334, %s335
      %p346 = scmp.eq.s32.totalorder %s50, 0
      %p347 = por %p345, %p346
      %p348 = scmp.ne.s32.totalorder %s334, %s335
      %p349 = scmp.eq.s32.totalorder %s51, 1
      %p350 = por %p348, %p349
      %p352 = scmp.ne.s32.totalorder %s335, %s351
      %p353 = scmp.eq.s32.totalorder %s51, 0
      %p354 = por %p352, %p353
      %s355 = ssub.s32 %s53, %s60
      %p356 = scmp.eq.s32.totalorder %s355, 0
      %s358 = sadd.s32 %s357, 1
      %s359 = scalar_select %p356, %s357, %s358
      %p362 = pneg %p356
      %p363 = scmp.eq.s32.totalorder %s45, 1
      %p364 = por %p362, %p363
      %p365 = scmp.ne.s32.totalorder %s357, %s360
      %p366 = scmp.eq.s32.totalorder %s45, 0
      %p367 = por %p365, %p366
      %p368 = scmp.ne.s32.totalorder %s357, %s360
      %p369 = scmp.eq.s32.totalorder %s50, 1
      %p370 = por %p368, %p369
      %p371 = scmp.ne.s32.totalorder %s360, %s361
      %p372 = scmp.eq.s32.totalorder %s50, 0
      %p373 = por %p371, %p372
      %p374 = scmp.ne.s32.totalorder %s360, %s361
      %p375 = scmp.eq.s32.totalorder %s51, 1
      %p376 = por %p374, %p375
      %p378 = scmp.ne.s32.totalorder %s361, %s377
      %p379 = scmp.eq.s32.totalorder %s51, 0
      %p380 = por %p378, %p379
      %s381 = ssub.s32 %s53, %s60
      %p382 = scmp.eq.s32.totalorder %s381, 0
      %s384 = sadd.s32 %s383, 1
      %s385 = scalar_select %p382, %s383, %s384
      %p388 = pneg %p382
      %p389 = scmp.eq.s32.totalorder %s45, 1
      %p390 = por %p388, %p389
      %p391 = scmp.ne.s32.totalorder %s383, %s386
      %p392 = scmp.eq.s32.totalorder %s45, 0
      %p393 = por %p391, %p392
      %p394 = scmp.ne.s32.totalorder %s383, %s386
      %p395 = scmp.eq.s32.totalorder %s50, 1
      %p396 = por %p394, %p395
      %p397 = scmp.ne.s32.totalorder %s386, %s387
      %p398 = scmp.eq.s32.totalorder %s50, 0
      %p399 = por %p397, %p398
      %p400 = scmp.ne.s32.totalorder %s386, %s387
      %p401 = scmp.eq.s32.totalorder %s51, 1
      %p402 = por %p400, %p401
      %p404 = scmp.ne.s32.totalorder %s387, %s403
      %p405 = scmp.eq.s32.totalorder %s51, 0
      %p406 = por %p404, %p405
      %s407 = ssub.s32 %s53, %s60
      %p408 = scmp.eq.s32.totalorder %s407, 0
      %s410 = sadd.s32 %s409, 1
      %s411 = scalar_select %p408, %s409, %s410
      %p414 = pneg %p408
      %p415 = scmp.eq.s32.totalorder %s45, 1
      %p416 = por %p414, %p415
      %p417 = scmp.ne.s32.totalorder %s409, %s412
      %p418 = scmp.eq.s32.totalorder %s45, 0
      %p419 = por %p417, %p418
      %p420 = scmp.ne.s32.totalorder %s409, %s412
      %p421 = scmp.eq.s32.totalorder %s50, 1
      %p422 = por %p420, %p421
      %p423 = scmp.ne.s32.totalorder %s412, %s413
      %p424 = scmp.eq.s32.totalorder %s50, 0
      %p425 = por %p423, %p424
      %p426 = scmp.ne.s32.totalorder %s412, %s413
      %p427 = scmp.eq.s32.totalorder %s51, 1
      %p428 = por %p426, %p427
      %p430 = scmp.ne.s32.totalorder %s413, %s429
      %p431 = scmp.eq.s32.totalorder %s51, 0
      %p432 = por %p430, %p431
      %s433 = ssub.s32 %s52, %s64
      %s434 = ssub.s32 %s53, %s60
      %s435 = sor.u32 %s433, %s434
      %p436 = scmp.eq.s32.totalorder %s435, 0
      %s438 = sadd.s32 %s437, 1
      %s439 = scalar_select %p436, %s437, %s438
      %p442 = pneg %p436
      %p443 = scmp.eq.s32.totalorder %s45, 1
      %p444 = por %p442, %p443
      %p445 = scmp.ne.s32.totalorder %s437, %s440
      %p446 = scmp.eq.s32.totalorder %s45, 0
      %p447 = por %p445, %p446
      %p448 = scmp.ne.s32.totalorder %s437, %s440
      %p449 = scmp.eq.s32.totalorder %s50, 1
      %p450 = por %p448, %p449
      %p451 = scmp.ne.s32.totalorder %s440, %s441
      %p452 = scmp.eq.s32.totalorder %s50, 0
      %p453 = por %p451, %p452
      %p454 = scmp.ne.s32.totalorder %s440, %s441
      %p455 = scmp.eq.s32.totalorder %s51, 1
      %p456 = por %p454, %p455
      %p458 = scmp.ne.s32.totalorder %s441, %s457
      %p459 = scmp.eq.s32.totalorder %s51, 0
      %p460 = por %p458, %p459
      %s461 = ssub.s32 %s52, %s64
      %s462 = ssub.s32 %s53, %s60
      %s463 = sor.u32 %s461, %s462
      %p464 = scmp.eq.s32.totalorder %s463, 0
      %s466 = sadd.s32 %s465, 1
      %s467 = scalar_select %p464, %s465, %s466
      %p470 = pneg %p464
      %p471 = scmp.eq.s32.totalorder %s45, 1
      %p472 = por %p470, %p471
      %p473 = scmp.ne.s32.totalorder %s465, %s468
      %p474 = scmp.eq.s32.totalorder %s45, 0
      %p475 = por %p473, %p474
      %p476 = scmp.ne.s32.totalorder %s465, %s468
      %p477 = scmp.eq.s32.totalorder %s50, 1
      %p478 = por %p476, %p477
      %p479 = scmp.ne.s32.totalorder %s468, %s469
      %p480 = scmp.eq.s32.totalorder %s50, 0
      %p481 = por %p479, %p480
      %p482 = scmp.ne.s32.totalorder %s468, %s469
      %p483 = scmp.eq.s32.totalorder %s51, 1
      %p484 = por %p482, %p483
      %p486 = scmp.ne.s32.totalorder %s469, %s485
      %p487 = scmp.eq.s32.totalorder %s51, 0
      %p488 = por %p486, %p487
      %s489 = ssub.s32 %s52, %s64
      %s490 = ssub.s32 %s53, %s60
      %s491 = sor.u32 %s489, %s490
      %p492 = scmp.eq.s32.totalorder %s491, 0
      %s494 = sadd.s32 %s493, 1
      %s495 = scalar_select %p492, %s493, %s494
      %p498 = pneg %p492
      %p499 = scmp.eq.s32.totalorder %s45, 1
      %p500 = por %p498, %p499
      %p501 = scmp.ne.s32.totalorder %s493, %s496
      %p502 = scmp.eq.s32.totalorder %s45, 0
      %p503 = por %p501, %p502
      %p504 = scmp.ne.s32.totalorder %s493, %s496
      %p505 = scmp.eq.s32.totalorder %s50, 1
      %p506 = por %p504, %p505
      %p507 = scmp.ne.s32.totalorder %s496, %s497
      %p508 = scmp.eq.s32.totalorder %s50, 0
      %p509 = por %p507, %p508
      %p510 = scmp.ne.s32.totalorder %s496, %s497
      %p511 = scmp.eq.s32.totalorder %s51, 1
      %p512 = por %p510, %p511
      %p514 = scmp.ne.s32.totalorder %s497, %s513
      %p515 = scmp.eq.s32.totalorder %s51, 0
      %p516 = por %p514, %p515
      %s517 = ssub.s32 %s52, %s64
      %p518 = scmp.eq.s32.totalorder %s517, 0
      %s520 = sadd.s32 %s519, 1
      %s521 = scalar_select %p518, %s519, %s520
      %p524 = pneg %p518
      %p525 = scmp.eq.s32.totalorder %s45, 1
      %p526 = por %p524, %p525
      %p527 = scmp.ne.s32.totalorder %s519, %s522
      %p528 = scmp.eq.s32.totalorder %s45, 0
      %p529 = por %p527, %p528
      %p530 = scmp.ne.s32.totalorder %s519, %s522
      %p531 = scmp.eq.s32.totalorder %s50, 1
      %p532 = por %p530, %p531
      %p533 = scmp.ne.s32.totalorder %s522, %s523
      %p534 = scmp.eq.s32.totalorder %s50, 0
      %p535 = por %p533, %p534
      %p536 = scmp.ne.s32.totalorder %s522, %s523
      %p537 = scmp.eq.s32.totalorder %s51, 1
      %p538 = por %p536, %p537
      %p540 = scmp.ne.s32.totalorder %s523, %s539
      %p541 = scmp.eq.s32.totalorder %s51, 0
      %p542 = por %p540, %p541
      %p543 = scmp.le.s32.totalorder 1, %s45
      %p544 = scmp.lt.s32.totalorder %s45, 3
      %p545 = pnand %p543, %p544
      %p546 = pneg %p545
      // Predicated region
      $region9: #{tpu_custom_call.1} parent=5 // pred_check
        _
      $region10: #{tpu_custom_call.1} parent=5 // pred_check_branch
        %548 = sbr.rel (%p545) target = $region12
      $region11: #{tpu_custom_call.1} parent=5 // pred_region
        %s549 = ssub.s32 %s45, 1
        // Predicated region
        $region13: #{tpu_custom_call.1} parent=11 // pred_check
          %p550 = pneg %p132
        $region14: #{tpu_custom_call.1} parent=11 // pred_check_branch
          %552 = sbr.rel (%p550) target = $region16
        $region15: #{tpu_custom_call.1} parent=11 // pred_region
          %s554 = ssub.s32 512, 512
          %555 = vsyncadd [#allocation6], %s554
          %s556 = sshll.u32 [#allocation7], 4
          %s557 = int_to_ptr.vmem [resolvable:$true] %s556
          %562 = dma.hbm_to_vmem [thread:$0]  %s2, 512, %s557, [#allocation6], 128, 128, 8
        $region16: #{tpu_custom_call.1} parent=11 // pred_fallthru
          _
        // Predicated region
        $region17: #{tpu_custom_call.1} parent=11 // pred_check
          %p563 = pneg %p153
        $region18: #{tpu_custom_call.1} parent=11 // pred_check_branch
          %565 = sbr.rel (%p563) target = $region20
        $region19: #{tpu_custom_call.1} parent=11 // pred_region
          %s567 = ssub.s32 32, 32
          %568 = vsyncadd [#allocation9], %s567
          %s570 = sshll.u32 [#allocation8], 4
          %s571 = int_to_ptr.vmem [resolvable:$true] %s570
          %573 = dma.hbm_to_vmem [thread:$0]  %s3, 32, %s571, [#allocation9]
        $region20: #{tpu_custom_call.1} parent=11 // pred_fallthru
          _
        // Predicated region
        $region21: #{tpu_custom_call.1} parent=11 // pred_check
          %p574 = pneg %p174
        $region22: #{tpu_custom_call.1} parent=11 // pred_check_branch
          %576 = sbr.rel (%p574) target = $region24
        $region23: #{tpu_custom_call.1} parent=11 // pred_region
          %s578 = ssub.s32 256, 256
          %579 = vsyncadd [#allocation9], %s578
          %s580 = sshll.u32 [#allocation10], 4
          %s581 = int_to_ptr.vmem [resolvable:$true] %s580
          %586 = dma.hbm_to_vmem [thread:$0]  %s4, 256, %s581, [#allocation9], 64, 64, 4
        $region24: #{tpu_custom_call.1} parent=11 // pred_fallthru
          _
        // Predicated region
        $region25: #{tpu_custom_call.1} parent=11 // pred_check
          %p587 = pneg %p195
        $region26: #{tpu_custom_call.1} parent=11 // pred_check_branch
          %589 = sbr.rel (%p587) target = $region28
        $region27: #{tpu_custom_call.1} parent=11 // pred_region
          _
        $region28: #{tpu_custom_call.1} parent=11 // pred_fallthru
          _
        // Predicated region
        $region29: #{tpu_custom_call.1} parent=11 // pred_check
          %p590 = pneg %p216
        $region30: #{tpu_custom_call.1} parent=11 // pred_check_branch
          %592 = sbr.rel (%p590) target = $region32
        $region31: #{tpu_custom_call.1} parent=11 // pred_region
          _
        $region32: #{tpu_custom_call.1} parent=11 // pred_fallthru
          _
        // Predicated region
        $region33: #{tpu_custom_call.1} parent=11 // pred_check
          %p593 = pneg %p237
        $region34: #{tpu_custom_call.1} parent=11 // pred_check_branch
          %595 = sbr.rel (%p593) target = $region36
        $region35: #{tpu_custom_call.1} parent=11 // pred_region
          %s597 = ssub.s32 16, 16
          %598 = vsyncadd [#allocation12], %s597
          %s600 = sshll.u32 [#allocation11], 4
          %s601 = int_to_ptr.vmem [resolvable:$true] %s600
          %603 = dma.hbm_to_vmem [thread:$0]  %s7, 16, %s601, [#allocation12]
        $region36: #{tpu_custom_call.1} parent=11 // pred_fallthru
          _
        // Predicated region
        $region37: #{tpu_custom_call.1} parent=11 // pred_check
          %p604 = pneg %p258
        $region38: #{tpu_custom_call.1} parent=11 // pred_check_branch
          %606 = sbr.rel (%p604) target = $region40
        $region39: #{tpu_custom_call.1} parent=11 // pred_region
          %s608 = ssub.s32 256, 256
          %609 = vsyncadd [#allocation12], %s608
          %s610 = sshll.u32 [#allocation13], 4
          %s611 = int_to_ptr.vmem [resolvable:$true] %s610
          %616 = dma.hbm_to_vmem [thread:$0]  %s8, 256, %s611, [#allocation12], 64, 64, 4
        $region40: #{tpu_custom_call.1} parent=11 // pred_fallthru
          _
        // Predicated region
        $region41: #{tpu_custom_call.1} parent=11 // pred_check
          %p617 = pneg %p279
        $region42: #{tpu_custom_call.1} parent=11 // pred_check_branch
          %619 = sbr.rel (%p617) target = $region44
        $region43: #{tpu_custom_call.1} parent=11 // pred_region
          %s621 = ssub.s32 16, 16
          %622 = vsyncadd [#allocation15], %s621
          %s624 = sshll.u32 [#allocation14], 4
          %s625 = int_to_ptr.vmem [resolvable:$true] %s624
          %627 = dma.hbm_to_vmem [thread:$0]  %s9, 16, %s625, [#allocation15]
        $region44: #{tpu_custom_call.1} parent=11 // pred_fallthru
          _
        // Predicated region
        $region45: #{tpu_custom_call.1} parent=11 // pred_check
          %p628 = pneg %p300
        $region46: #{tpu_custom_call.1} parent=11 // pred_check_branch
          %630 = sbr.rel (%p628) target = $region48
        $region47: #{tpu_custom_call.1} parent=11 // pred_region
          %s632 = ssub.s32 16, 16
          %633 = vsyncadd [#allocation15], %s632
          %s635 = sshll.u32 [#allocation16], 4
          %s636 = int_to_ptr.vmem [resolvable:$true] %s635
          %638 = dma.hbm_to_vmem [thread:$0]  %s10, 16, %s636, [#allocation15]
        $region48: #{tpu_custom_call.1} parent=11 // pred_fallthru
          _
        // Predicated region
        $region49: #{tpu_custom_call.1} parent=11 // pred_check
          %p639 = pneg %p321
        $region50: #{tpu_custom_call.1} parent=11 // pred_check_branch
          %641 = sbr.rel (%p639) target = $region52
        $region51: #{tpu_custom_call.1} parent=11 // pred_region
          %s643 = ssub.s32 16, 16
          %644 = vsyncadd [#allocation18], %s643
          %s646 = sshll.u32 [#allocation17], 4
          %s647 = int_to_ptr.vmem [resolvable:$true] %s646
          %649 = dma.hbm_to_vmem [thread:$0]  %s11, 16, %s647, [#allocation18]
        $region52: #{tpu_custom_call.1} parent=11 // pred_fallthru
          _
        // Predicated region
        $region53: #{tpu_custom_call.1} parent=11 // pred_check
          %p650 = pneg %p347
        $region54: #{tpu_custom_call.1} parent=11 // pred_check_branch
          %652 = sbr.rel (%p650) target = $region56
        $region55: #{tpu_custom_call.1} parent=11 // pred_region
          %p653 = scmp.lt.s32.totalorder %s55, 0
          %s654 = scalar_select %p653, %s55, 0
          %s655 = smul.addr %s654, 8
          %s656 = scalar_lea.vmem %s12, %s655
        $region56: #{tpu_custom_call.1} parent=11 // pred_fallthru
          _
        // Predicated region
        $region57: #{tpu_custom_call.1} parent=11 // pred_check
          %p657 = pneg %p373
        $region58: #{tpu_custom_call.1} parent=11 // pred_check_branch
          %659 = sbr.rel (%p657) target = $region60
        $region59: #{tpu_custom_call.1} parent=11 // pred_region
          %p660 = scmp.lt.s32.totalorder %s55, 0
          %s661 = scalar_select %p660, %s55, 0
          %s662 = smul.addr %s661, 8
          %s663 = scalar_lea.vmem %s13, %s662
        $region60: #{tpu_custom_call.1} parent=11 // pred_fallthru
          _
        // Predicated region
        $region61: #{tpu_custom_call.1} parent=11 // pred_check
          %p664 = pneg %p399
        $region62: #{tpu_custom_call.1} parent=11 // pred_check_branch
          %666 = sbr.rel (%p664) target = $region64
        $region63: #{tpu_custom_call.1} parent=11 // pred_region
          %p667 = scmp.lt.s32.totalorder %s55, 0
          %s668 = scalar_select %p667, %s55, 0
          %s669 = smul.addr %s668, 8
          %s670 = scalar_lea.vmem %s14, %s669
        $region64: #{tpu_custom_call.1} parent=11 // pred_fallthru
          _
        // Predicated region
        $region65: #{tpu_custom_call.1} parent=11 // pred_check
          %p671 = pneg %p425
        $region66: #{tpu_custom_call.1} parent=11 // pred_check_branch
          %673 = sbr.rel (%p671) target = $region68
        $region67: #{tpu_custom_call.1} parent=11 // pred_region
          %p674 = scmp.lt.s32.totalorder %s55, 0
          %s675 = scalar_select %p674, %s55, 0
          %s676 = smul.addr %s675, 8
          %s677 = scalar_lea.vmem %s15, %s676
        $region68: #{tpu_custom_call.1} parent=11 // pred_fallthru
          _
      $region12: #{tpu_custom_call.1} parent=5 // pred_fallthru
        _
      %p678 = scmp.lt.s32.totalorder %s45, 2
      // Predicated region
      $region69: #{tpu_custom_call.1} parent=5 // pred_check
        %p679 = pneg %p678
      $region70: #{tpu_custom_call.1} parent=5 // pred_check_branch
        %681 = sbr.rel (%p679) target = $region72
      $region71: #{tpu_custom_call.1} parent=5 // pred_region
        // Predicated region
        $region73: #{tpu_custom_call.1} parent=71 // pred_check
          %p682 = pneg %p79
        $region74: #{tpu_custom_call.1} parent=71 // pred_check_branch
          %684 = sbr.rel (%p682) target = $region76
        $region75: #{tpu_custom_call.1} parent=71 // pred_region
          %s685 = sand.u32 %s69, 1
          %s686 = scalar_lea.sflag [#allocation3], %s685
          %s687 = sand.u32 %s69, 1
          %s688 = smul.addr %s687, 8
          %s689 = scalar_lea.vmem [#allocation2], %s688
          %s691 = ssub.s32 128, 128
          %692 = vsyncadd %s686, %s691
          %s693 = sadd.s32 %s53, %s52
          %s694 = smul.addr %s693, 128
          %s695 = scalar_lea.hbm %s0, %s694
          %s697 = sshll.u32 %s689, 4
          %s698 = int_to_ptr.vmem [resolvable:$true] %s697
          %700 = dma.hbm_to_vmem [thread:$0]  %s695, 128, %s698, %s686
        $region76: #{tpu_custom_call.1} parent=71 // pred_fallthru
          _
        // Predicated region
        $region77: #{tpu_custom_call.1} parent=71 // pred_check
          %p701 = pneg %p105
        $region78: #{tpu_custom_call.1} parent=71 // pred_check_branch
          %703 = sbr.rel (%p701) target = $region80
        $region79: #{tpu_custom_call.1} parent=71 // pred_region
          %s704 = sand.u32 %s45, 1
          %s705 = scalar_lea.sflag [#allocation6], %s704
          %s706 = sand.u32 %s95, 1
          %s707 = scalar_lea.vmem [#allocation5], %s706
          %s709 = ssub.s32 16, 16
          %710 = vsyncadd %s705, %s709
          %s711 = smul.addr %s52, 16
          %s712 = scalar_lea.hbm %s1, %s711
          %s714 = sshll.u32 %s707, 4
          %s715 = int_to_ptr.vmem [resolvable:$true] %s714
          %717 = dma.hbm_to_vmem [thread:$0]  %s712, 16, %s715, %s705
        $region80: #{tpu_custom_call.1} parent=71 // pred_fallthru
          _
      $region72: #{tpu_custom_call.1} parent=5 // pred_fallthru
        _
      %p718 = scmp.le.s32.totalorder 1, %s45
      %p719 = scmp.lt.s32.totalorder %s45, 3
      %p720 = pnand %p718, %p719
      %p721 = pneg %p720
      // Predicated region
      $region81: #{tpu_custom_call.1} parent=5 // pred_check
        _
      $region82: #{tpu_custom_call.1} parent=5 // pred_check_branch
        %723 = sbr.rel (%p720) target = $region84
      $region83: #{tpu_custom_call.1} parent=5 // pred_region
        %s724 = ssub.s32 %s45, 1
        %s725 = sand.u32 %s72, 1
        %s726 = scalar_lea.sflag [#allocation3], %s725
        %s727 = sand.u32 %s72, 1
        %s728 = smul.addr %s727, 8
        %s729 = scalar_lea.vmem [#allocation2], %s728
        // Predicated region
        $region85: #{tpu_custom_call.1} parent=83 // pred_check
          %p730 = pneg %p85
        $region86: #{tpu_custom_call.1} parent=83 // pred_check_branch
          %732 = sbr.rel (%p730) target = $region88
        $region87: #{tpu_custom_call.1} parent=83 // pred_region
          %733 = dma.done %s726, 128
        $region88: #{tpu_custom_call.1} parent=83 // pred_fallthru
          _
        %s734 = sand.u32 %s50, 1
        %s735 = scalar_lea.sflag [#allocation6], %s734
        %s736 = sand.u32 %s98, 1
        %s737 = scalar_lea.vmem [#allocation5], %s736
        // Predicated region
        $region89: #{tpu_custom_call.1} parent=83 // pred_check
          %p738 = pneg %p111
        $region90: #{tpu_custom_call.1} parent=83 // pred_check_branch
          %740 = sbr.rel (%p738) target = $region92
        $region91: #{tpu_custom_call.1} parent=83 // pred_region
          %741 = dma.done %s735, 16
        $region92: #{tpu_custom_call.1} parent=83 // pred_fallthru
          _
        // Predicated region
        $region93: #{tpu_custom_call.1} parent=83 // pred_check
          %p742 = pneg %p132
        $region94: #{tpu_custom_call.1} parent=83 // pred_check_branch
          %744 = sbr.rel (%p742) target = $region96
        $region95: #{tpu_custom_call.1} parent=83 // pred_region
          %745 = dma.done [#allocation6], 512
        $region96: #{tpu_custom_call.1} parent=83 // pred_fallthru
          _
        // Predicated region
        $region97: #{tpu_custom_call.1} parent=83 // pred_check
          %p746 = pneg %p153
        $region98: #{tpu_custom_call.1} parent=83 // pred_check_branch
          %748 = sbr.rel (%p746) target = $region100
        $region99: #{tpu_custom_call.1} parent=83 // pred_region
          %749 = dma.done [#allocation9], 32
        $region100: #{tpu_custom_call.1} parent=83 // pred_fallthru
          _
        // Predicated region
        $region101: #{tpu_custom_call.1} parent=83 // pred_check
          %p750 = pneg %p174
        $region102: #{tpu_custom_call.1} parent=83 // pred_check_branch
          %752 = sbr.rel (%p750) target = $region104
        $region103: #{tpu_custom_call.1} parent=83 // pred_region
          %753 = dma.done [#allocation9], 256
        $region104: #{tpu_custom_call.1} parent=83 // pred_fallthru
          _
        // Predicated region
        $region105: #{tpu_custom_call.1} parent=83 // pred_check
          %p754 = pneg %p237
        $region106: #{tpu_custom_call.1} parent=83 // pred_check_branch
          %756 = sbr.rel (%p754) target = $region108
        $region107: #{tpu_custom_call.1} parent=83 // pred_region
          %757 = dma.done [#allocation12], 16
        $region108: #{tpu_custom_call.1} parent=83 // pred_fallthru
          _
        // Predicated region
        $region109: #{tpu_custom_call.1} parent=83 // pred_check
          %p758 = pneg %p258
        $region110: #{tpu_custom_call.1} parent=83 // pred_check_branch
          %760 = sbr.rel (%p758) target = $region112
        $region111: #{tpu_custom_call.1} parent=83 // pred_region
          %761 = dma.done [#allocation12], 256
        $region112: #{tpu_custom_call.1} parent=83 // pred_fallthru
          _
        // Predicated region
        $region113: #{tpu_custom_call.1} parent=83 // pred_check
          %p762 = pneg %p279
        $region114: #{tpu_custom_call.1} parent=83 // pred_check_branch
          %764 = sbr.rel (%p762) target = $region116
        $region115: #{tpu_custom_call.1} parent=83 // pred_region
          %765 = dma.done [#allocation15], 16
        $region116: #{tpu_custom_call.1} parent=83 // pred_fallthru
          _
        // Predicated region
        $region117: #{tpu_custom_call.1} parent=83 // pred_check
          %p766 = pneg %p300
        $region118: #{tpu_custom_call.1} parent=83 // pred_check_branch
          %768 = sbr.rel (%p766) target = $region120
        $region119: #{tpu_custom_call.1} parent=83 // pred_region
          %769 = dma.done [#allocation15], 16
        $region120: #{tpu_custom_call.1} parent=83 // pred_fallthru
          _
        // Predicated region
        $region121: #{tpu_custom_call.1} parent=83 // pred_check
          %p770 = pneg %p321
        $region122: #{tpu_custom_call.1} parent=83 // pred_check_branch
          %772 = sbr.rel (%p770) target = $region124
        $region123: #{tpu_custom_call.1} parent=83 // pred_region
          %773 = dma.done [#allocation18], 16
        $region124: #{tpu_custom_call.1} parent=83 // pred_fallthru
          _
        %s774 = sand.u32 %s72, 1
        %s775 = scalar_lea.sflag [#allocation3], %s774
        %s776 = sand.u32 %s72, 1
        %s777 = smul.addr %s776, 8
        %s778 = scalar_lea.vmem [#allocation2], %s777
        %p779 = pneg %p85
        %p780 = pneg %p82
        %s781 = sand.u32 %s50, 1
        %s782 = scalar_lea.sflag [#allocation6], %s781
        %s783 = sand.u32 %s98, 1
        %s784 = scalar_lea.vmem [#allocation5], %s783
        %p785 = pneg %p111
        %p786 = pneg %p108
        %p787 = pneg %p132
        %p788 = pneg %p129
        %p789 = pneg %p153
        %p790 = pneg %p150
        %p791 = pneg %p174
        %p792 = pneg %p171
        %p793 = pneg %p195
        %p794 = pneg %p192
        %p795 = pneg %p216
        %p796 = pneg %p213
        %p797 = pneg %p237
        %p798 = pneg %p234
        %p799 = pneg %p258
        %p800 = pneg %p255
        %p801 = pneg %p279
        %p802 = pneg %p276
        %p803 = pneg %p300
        %p804 = pneg %p297
        %p805 = pneg %p321
        %p806 = pneg %p318
        %p807 = scmp.lt.s32.totalorder %s55, 0
        %s808 = scalar_select %p807, %s55, 0
        %s809 = smul.addr %s808, 8
        %s810 = scalar_lea.vmem %s12, %s809
        %p811 = pneg %p347
        %p812 = pneg %p344
        %p813 = scmp.lt.s32.totalorder %s55, 0
        %s814 = scalar_select %p813, %s55, 0
        %s815 = smul.addr %s814, 8
        %s816 = scalar_lea.vmem %s13, %s815
        %p817 = pneg %p373
        %p818 = pneg %p370
        %p819 = scmp.lt.s32.totalorder %s55, 0
        %s820 = scalar_select %p819, %s55, 0
        %s821 = smul.addr %s820, 8
        %s822 = scalar_lea.vmem %s14, %s821
        %p823 = pneg %p399
        %p824 = pneg %p396
        %p825 = scmp.lt.s32.totalorder %s55, 0
        %s826 = scalar_select %p825, %s55, 0
        %s827 = smul.addr %s826, 8
        %s828 = scalar_lea.vmem %s15, %s827
        %p829 = pneg %p425
        %p830 = pneg %p422
        %p831 = pneg %p453
        %p832 = pneg %p450
        %s833 = sand.u32 %s440, 1
        %s834 = scalar_lea.sflag [#allocation4], %s833
        %s835 = sand.u32 %s440, 1
        %s836 = smul.addr %s835, 16
        %s837 = scalar_lea.vmem [#allocation19], %s836
        %p838 = pneg %p481
        %p839 = pneg %p478
        %s840 = sand.u32 %s50, 1
        %s841 = scalar_lea.sflag [#allocation21], %s840
        %s842 = sand.u32 %s468, 1
        %s843 = smul.addr %s842, 16
        %s844 = scalar_lea.vmem [#allocation20], %s843
        %p845 = pneg %p509
        %p846 = pneg %p506
        %s847 = sand.u32 %s50, 1
        %s848 = scalar_lea.sflag [#allocation21], %s847
        %s849 = sand.u32 %s496, 1
        %s850 = smul.addr %s849, 16
        %s851 = scalar_lea.vmem [#allocation22], %s850
        %p852 = pneg %p535
        %p853 = pneg %p532
        %s854 = sand.u32 %s522, 1
        %s855 = scalar_lea.sflag [#allocation24], %s854
        %s856 = sand.u32 %s522, 1
        %s857 = smul.addr %s856, 2
        %s858 = scalar_lea.vmem [#allocation23], %s857
        %p859 = scmp.lt.s32.totalorder %s55, 0
        %s860 = scalar_select %p859, %s55, 0
        %s861 = smul.addr %s860, 8
        %s862 = scalar_lea.vmem %s12, %s861
        %p863 = scmp.lt.s32.totalorder %s55, 0
        %s864 = scalar_select %p863, %s55, 0
        %s865 = smul.addr %s864, 8
        %s866 = scalar_lea.vmem %s13, %s865
        %p867 = scmp.lt.s32.totalorder %s55, 0
        %s868 = scalar_select %p867, %s55, 0
        %s869 = smul.addr %s868, 8
        %s870 = scalar_lea.vmem %s14, %s869
        %p871 = scmp.lt.s32.totalorder %s55, 0
        %s872 = scalar_select %p871, %s55, 0
        %s873 = smul.addr %s872, 8
        %s874 = scalar_lea.vmem %s15, %s873
        %v876 = vld [vmem:[%s729] sm:$0xff]
        %v877 = vld [vmem:[%s737] sm:$0x1]
        %v878 = vxor.u32 %v877, 2147483648
        %v879 = vmul.f32 %v878, 1.442695
        %v880 = vpow.pop %v879
        %v881 = vadd.f32 %v880, 1.0
        %v882 = vrcp.pop %v881
        %v883 = vmul.f32 1.0, %v882
        %v884 = vmul.f32 %v877, %v883
        %v885 = vpack.c.bf16 %v884, %v884
        %v886 = vld [vmem:[#allocation7] sm:$0xff]
        %v887 = vld [vmem:[#allocation7 + $0x8] sm:$0xff]
        %v888 = vld [vmem:[#allocation7 + $0x10] sm:$0xff]
        %v889 = vld [vmem:[#allocation7 + $0x18] sm:$0xff]
        %v890 = vld [vmem:[#allocation8] sm:$0x3]
        %v895 = vunpack.c.l.b16 %v886
        %v896 = vunpack.c.h.b16 %v886
        %v897 = vunpack.c.l.b16 %v887
        %v898 = vunpack.c.h.b16 %v887
        %v899 = vunpack.c.l.b16 %v888
        %v900 = vunpack.c.h.b16 %v888
        %v901 = vunpack.c.l.b16 %v889
        %v902 = vunpack.c.h.b16 %v889
        %v903 = vpack.c.b16 %v897, %v895
        %v904 = vpack.c.b16 %v898, %v896
        %v905 = vpack.c.b16 %v901, %v899
        %v906 = vpack.c.b16 %v902, %v900
        %v912 = vlaneseq
        %v913 = vshrl.u32 %v912, 7
        %v914 = vsub.s32 0, %v913
        %v915 = vrot.slane %v890, %v914
        %v916 = vlaneseq
        %v917 = vshrl.u32 %v916, 7
        %v918 = vsub.s32 1, %v917
        %v919 = vrot.slane %v890, %v918
        %vm922 = vcmask 261120
        %v924 = vsel %vm922, %v885, 0
        %926 = vmatprep.subr.bf16.mxu0 %v904
        %927 = vmatpush1.bf16.msra.mxu0 %v903
        %928 = vmatprep.subr.bf16.mxu0 %v906
        %929 = vmatpush1.bf16.msra.mxu0 %v905
        %930 = vmatprep.subr.bf16.mxu0 0
        %931 = vmatpush1.bf16.msra.mxu0 0
        %932 = vmatprep.subr.bf16.mxu0 0
        %933 = vmatpush1.bf16.msra.mxu0 0
        %934 = vmatprep.subr.bf16.mxu0 0
        %935 = vmatpush1.bf16.msra.mxu0 0
        %936 = vmatprep.subr.bf16.mxu0 0
        %937 = vmatpush1.bf16.msra.mxu0 0
        %938 = vmatprep.subr.bf16.mxu0 0
        %939 = vmatpush1.bf16.msra.mxu0 0
        %940 = vmatprep.subr.bf16.mxu0 0
        %941 = vmatpush1.bf16.msra.mxu0 0
        %942 = vmatprep.subr.bf16.mxu0 0
        %943 = vmatpush1.bf16.msra.mxu0 0
        %944 = vmatprep.subr.bf16.mxu0 0
        %945 = vmatpush1.bf16.msra.mxu0 0
        %946 = vmatprep.subr.bf16.mxu0 0
        %947 = vmatpush1.bf16.msra.mxu0 0
        %948 = vmatprep.subr.bf16.mxu0 0
        %949 = vmatpush1.bf16.msra.mxu0 0
        %950 = vmatprep.subr.bf16.mxu0 0
        %951 = vmatpush1.bf16.msra.mxu0 0
        %952 = vmatprep.subr.bf16.mxu0 0
        %953 = vmatpush1.bf16.msra.mxu0 0
        %954 = vmatprep.subr.bf16.mxu0 0
        %955 = vmatpush1.bf16.msra.mxu0 0
        %956 = vmatprep.subr.bf16.mxu0 0
        %957 = vmatpush1.bf16.msra.mxu0 0
        %958 = vmatprep.mubr.bf16.mxu0 0
        %959 = vmatmul.mubr.bf16.gmra.mrb[0].mxu0 %v924
        %v960 = vpop.f32.mrb[0].mxu0
        %v961 = vadd.f32 %v915, %v960
        %v962 = vpop.f32.mrb[0].mxu0
        %v963 = vadd.f32 %v919, %v962
        %v964 = vpop.f32.mrb[0].mxu0
        %v965 = vpop.f32.mrb[0].mxu0
        %966 = vdwg.mxu0
        %v969 = vcombine.low %v961, %v963
        %v971 = vunpack.c.l.s4 1966171168
        %v972 = vunpack.c.0.s8 %v971
        %v973 = vlaneseq
        %v974 = vshrl.u32 %v973, 7
        %v975 = vsub.s32 %v972, %v974
        %v976 = vrot.slane %v969, %v975
        %v978 = vunpack.c.l.s4 1966171168
        %v979 = vunpack.c.0.s8 %v978
        %v980 = vlaneseq
        %v981 = vshrl.u32 %v980, 7
        %v982 = vsub.s32 %v979, %v981
        %v983 = vrot.slane %v976, %v982
        %v985 = vlaneseq
        %vm986 = vcmp.ge.s32.totalorder %v985, 0
        %vm987 = vcmp.lt.s32.totalorder %v985, 192
        %vm988 = vmand %vm986, %vm987
        %989 = vst.msk [vmem:[%s858] sm:$0x3] %vm988, %v983
        %v990 = vsel %vm922, %v876, 0.0
        %991 = vadd.xlane.f32.xlu0 %v990
        %v992 = vpop.xlane.xlu0 %991
        %v993 = vrcp.pop 32.0
        %v994 = vmul.f32 %v992, %v993
        %v995 = vsub.f32 %v876, %v994
        %v996 = vmul.f32 %v995, %v995
        %v997 = vsel %vm922, %v996, 0.0
        %998 = vadd.xlane.f32.xlu0 %v997
        %v999 = vpop.xlane.xlu0 %998
        %v1000 = vmul.f32 %v999, %v993
        %v1001 = vadd.f32 %v1000, 1e-06
        %v1002 = vrsqrt.pop %v1001
        %v1003 = vmul.f32 %v995, %v1002
        %v1004 = vadd.f32 %v961, 1.0
        %v1005 = vlaneseq
        %v1006 = vshrl.u32 %v1005, 7
        %v1007 = vsub.s32 0, %v1006
        %v1008 = vrot.slane %v1004, %v1007
        %1010 = vrot.lane.b32.xlu0 %v1008, 96
        %v1011 = vpop.permute.xlu0 %1010
        %v1013 = vmul.f32 %v1003, %v1011
        %v1014 = vlaneseq
        %v1015 = vshrl.u32 %v1014, 7
        %v1016 = vsub.s32 0, %v1015
        %v1017 = vrot.slane %v961, %v1016
        %v1018 = vadd.f32 %v1013, %v1017
        %v1019 = vpack.c.bf16 %v1018, %v1018
        %v1020 = vld [vmem:[#allocation10] sm:$0xf]
        %v1021 = vld [vmem:[#allocation10 + $0x4] sm:$0xf]
        %v1022 = vld [vmem:[#allocation10 + $0x8] sm:$0xf]
        %v1023 = vld [vmem:[#allocation10 + $0xc] sm:$0xf]
        %v1024 = vld [vmem:[%s5] sm:$0x1]
        %v1026 = vlaneseq
        %v1027 = vshrl.u32 %v1026, 7
        %v1028 = vsub.s32 0, %v1027
        %v1029 = vrot.slane %v1024, %v1028
        %v1035 = vunpack.c.l.b16 %v1020
        %v1036 = vunpack.c.l.b16 %v1021
        %v1037 = vunpack.c.l.b16 %v1022
        %v1038 = vunpack.c.l.b16 %v1023
        %v1039 = vpack.c.b16 %v1036, %v1035
        %v1040 = vpack.c.b16 %v1038, %v1037
        %v1044 = vsel %vm922, %v1019, 0
        %1046 = vmatprep.subr.bf16.mxu0 0
        %1047 = vmatpush1.bf16.msra.mxu0 %v1039
        %1048 = vmatprep.subr.bf16.mxu0 0
        %1049 = vmatpush1.bf16.msra.mxu0 %v1040
        %1050 = vmatprep.subr.bf16.mxu0 0
        %1051 = vmatpush1.bf16.msra.mxu0 0
        %1052 = vmatprep.subr.bf16.mxu0 0
        %1053 = vmatpush1.bf16.msra.mxu0 0
        %1054 = vmatprep.subr.bf16.mxu0 0
        %1055 = vmatpush1.bf16.msra.mxu0 0
        %1056 = vmatprep.subr.bf16.mxu0 0
        %1057 = vmatpush1.bf16.msra.mxu0 0
        %1058 = vmatprep.subr.bf16.mxu0 0
        %1059 = vmatpush1.bf16.msra.mxu0 0
        %1060 = vmatprep.subr.bf16.mxu0 0
        %1061 = vmatpush1.bf16.msra.mxu0 0
        %1062 = vmatprep.subr.bf16.mxu0 0
        %1063 = vmatpush1.bf16.msra.mxu0 0
        %1064 = vmatprep.subr.bf16.mxu0 0
        %1065 = vmatpush1.bf16.msra.mxu0 0
        %1066 = vmatprep.subr.bf16.mxu0 0
        %1067 = vmatpush1.bf16.msra.mxu0 0
        %1068 = vmatprep.subr.bf16.mxu0 0
        %1069 = vmatpush1.bf16.msra.mxu0 0
        %1070 = vmatprep.subr.bf16.mxu0 0
        %1071 = vmatpush1.bf16.msra.mxu0 0
        %1072 = vmatprep.subr.bf16.mxu0 0
        %1073 = vmatpush1.bf16.msra.mxu0 0
        %1074 = vmatprep.subr.bf16.mxu0 0
        %1075 = vmatpush1.bf16.msra.mxu0 0
        %1076 = vmatprep.subr.bf16.mxu0 0
        %1077 = vmatpush1.bf16.msra.mxu0 0
        %1078 = vmatprep.mubr.bf16.mxu0 0
        %1079 = vmatmul.mubr.bf16.gmra.mrb[0].mxu0 %v1044
        %v1080 = vpop.f32.mrb[0].mxu0
        %v1081 = vadd.f32 %v1029, %v1080
        %v1082 = vpop.f32.mrb[0].mxu0
        %v1083 = vpop.f32.mrb[0].mxu0
        %v1084 = vpop.f32.mrb[0].mxu0
        %1085 = vdwg.mxu0
        %v1086 = vld [vmem:[%s6] sm:$0xf]
        %v1087 = vld [vmem:[%s6 + $0x4] sm:$0xf]
        %v1088 = vld [vmem:[%s6 + $0x8] sm:$0xf]
        %v1089 = vld [vmem:[%s6 + $0xc] sm:$0xf]
        %v1090 = vld [vmem:[#allocation11] sm:$0x1]
        %v1092 = vlaneseq
        %v1093 = vshrl.u32 %v1092, 7
        %v1094 = vsub.s32 0, %v1093
        %v1095 = vrot.slane %v1090, %v1094
        %v1101 = vunpack.c.l.b16 %v1086
        %v1102 = vunpack.c.l.b16 %v1087
        %v1103 = vunpack.c.l.b16 %v1088
        %v1104 = vunpack.c.l.b16 %v1089
        %v1105 = vpack.c.b16 %v1102, %v1101
        %v1106 = vpack.c.b16 %v1104, %v1103
        %1109 = vmatprep.subr.bf16.mxu0 0
        %1110 = vmatpush1.bf16.msra.mxu0 %v1105
        %1111 = vmatprep.subr.bf16.mxu0 0
        %1112 = vmatpush1.bf16.msra.mxu0 %v1106
        %1113 = vmatprep.subr.bf16.mxu0 0
        %1114 = vmatpush1.bf16.msra.mxu0 0
        %1115 = vmatprep.subr.bf16.mxu0 0
        %1116 = vmatpush1.bf16.msra.mxu0 0
        %1117 = vmatprep.subr.bf16.mxu0 0
        %1118 = vmatpush1.bf16.msra.mxu0 0
        %1119 = vmatprep.subr.bf16.mxu0 0
        %1120 = vmatpush1.bf16.msra.mxu0 0
        %1121 = vmatprep.subr.bf16.mxu0 0
        %1122 = vmatpush1.bf16.msra.mxu0 0
        %1123 = vmatprep.subr.bf16.mxu0 0
        %1124 = vmatpush1.bf16.msra.mxu0 0
        %1125 = vmatprep.subr.bf16.mxu0 0
        %1126 = vmatpush1.bf16.msra.mxu0 0
        %1127 = vmatprep.subr.bf16.mxu0 0
        %1128 = vmatpush1.bf16.msra.mxu0 0
        %1129 = vmatprep.subr.bf16.mxu0 0
        %1130 = vmatpush1.bf16.msra.mxu0 0
        %1131 = vmatprep.subr.bf16.mxu0 0
        %1132 = vmatpush1.bf16.msra.mxu0 0
        %1133 = vmatprep.subr.bf16.mxu0 0
        %1134 = vmatpush1.bf16.msra.mxu0 0
        %1135 = vmatprep.subr.bf16.mxu0 0
        %1136 = vmatpush1.bf16.msra.mxu0 0
        %1137 = vmatprep.subr.bf16.mxu0 0
        %1138 = vmatpush1.bf16.msra.mxu0 0
        %1139 = vmatprep.subr.bf16.mxu0 0
        %1140 = vmatpush1.bf16.msra.mxu0 0
        %1141 = vmatprep.mubr.bf16.mxu0 0
        %1142 = vmatmul.mubr.bf16.gmra.mrb[0].mxu0 %v1044
        %v1143 = vpop.f32.mrb[0].mxu0
        %v1144 = vadd.f32 %v1095, %v1143
        %v1145 = vpop.f32.mrb[0].mxu0
        %v1146 = vpop.f32.mrb[0].mxu0
        %v1147 = vpop.f32.mrb[0].mxu0
        %1148 = vdwg.mxu0
        %v1149 = vld [vmem:[#allocation13] sm:$0xf]
        %v1150 = vld [vmem:[#allocation13 + $0x4] sm:$0xf]
        %v1151 = vld [vmem:[#allocation13 + $0x8] sm:$0xf]
        %v1152 = vld [vmem:[#allocation13 + $0xc] sm:$0xf]
        %v1153 = vld [vmem:[#allocation14] sm:$0x1]
        %v1155 = vlaneseq
        %v1156 = vshrl.u32 %v1155, 7
        %v1157 = vsub.s32 0, %v1156
        %v1158 = vrot.slane %v1153, %v1157
        %v1164 = vunpack.c.l.b16 %v1149
        %v1165 = vunpack.c.l.b16 %v1150
        %v1166 = vunpack.c.l.b16 %v1151
        %v1167 = vunpack.c.l.b16 %v1152
        %v1168 = vpack.c.b16 %v1165, %v1164
        %v1169 = vpack.c.b16 %v1167, %v1166
        %1172 = vmatprep.subr.bf16.mxu0 0
        %1173 = vmatpush1.bf16.msra.mxu0 %v1168
        %1174 = vmatprep.subr.bf16.mxu0 0
        %1175 = vmatpush1.bf16.msra.mxu0 %v1169
        %1176 = vmatprep.subr.bf16.mxu0 0
        %1177 = vmatpush1.bf16.msra.mxu0 0
        %1178 = vmatprep.subr.bf16.mxu0 0
        %1179 = vmatpush1.bf16.msra.mxu0 0
        %1180 = vmatprep.subr.bf16.mxu0 0
        %1181 = vmatpush1.bf16.msra.mxu0 0
        %1182 = vmatprep.subr.bf16.mxu0 0
        %1183 = vmatpush1.bf16.msra.mxu0 0
        %1184 = vmatprep.subr.bf16.mxu0 0
        %1185 = vmatpush1.bf16.msra.mxu0 0
        %1186 = vmatprep.subr.bf16.mxu0 0
        %1187 = vmatpush1.bf16.msra.mxu0 0
        %1188 = vmatprep.subr.bf16.mxu0 0
        %1189 = vmatpush1.bf16.msra.mxu0 0
        %1190 = vmatprep.subr.bf16.mxu0 0
        %1191 = vmatpush1.bf16.msra.mxu0 0
        %1192 = vmatprep.subr.bf16.mxu0 0
        %1193 = vmatpush1.bf16.msra.mxu0 0
        %1194 = vmatprep.subr.bf16.mxu0 0
        %1195 = vmatpush1.bf16.msra.mxu0 0
        %1196 = vmatprep.subr.bf16.mxu0 0
        %1197 = vmatpush1.bf16.msra.mxu0 0
        %1198 = vmatprep.subr.bf16.mxu0 0
        %1199 = vmatpush1.bf16.msra.mxu0 0
        %1200 = vmatprep.subr.bf16.mxu0 0
        %1201 = vmatpush1.bf16.msra.mxu0 0
        %1202 = vmatprep.subr.bf16.mxu0 0
        %1203 = vmatpush1.bf16.msra.mxu0 0
        %1204 = vmatprep.mubr.bf16.mxu0 0
        %1205 = vmatmul.mubr.bf16.gmra.mrb[0].mxu0 %v1044
        %v1206 = vpop.f32.mrb[0].mxu0
        %v1207 = vadd.f32 %v1158, %v1206
        %v1208 = vpop.f32.mrb[0].mxu0
        %v1209 = vpop.f32.mrb[0].mxu0
        %v1210 = vpop.f32.mrb[0].mxu0
        %1211 = vdwg.mxu0
        %v1212 = vmul.f32 %v1081, %v1081
        %v1213 = vsel %vm922, %v1212, 0.0
        %1214 = vadd.xlane.f32.xlu0 %v1213
        %v1215 = vpop.xlane.xlu0 %1214
        %v1216 = vmul.f32 %v1215, %v993
        %v1217 = vadd.f32 %v1216, 1e-06
        %v1218 = vrsqrt.pop %v1217
        %v1219 = vmul.f32 %v1081, %v1218
        %v1220 = vld [vmem:[#allocation16] sm:$0x1]
        %v1222 = vlaneseq
        %v1223 = vshrl.u32 %v1222, 7
        %v1224 = vsub.s32 0, %v1223
        %v1225 = vrot.slane %v1220, %v1224
        %v1227 = vmul.f32 %v1219, %v1225
        %v1228 = vmul.f32 %v1144, %v1144
        %v1229 = vsel %vm922, %v1228, 0.0
        %1230 = vadd.xlane.f32.xlu0 %v1229
        %v1231 = vpop.xlane.xlu0 %1230
        %v1232 = vmul.f32 %v1231, %v993
        %v1233 = vadd.f32 %v1232, 1e-06
        %v1234 = vrsqrt.pop %v1233
        %v1235 = vmul.f32 %v1144, %v1234
        %v1236 = vld [vmem:[#allocation17] sm:$0x1]
        %v1238 = vlaneseq
        %v1239 = vshrl.u32 %v1238, 7
        %v1240 = vsub.s32 0, %v1239
        %v1241 = vrot.slane %v1236, %v1240
        %v1243 = vmul.f32 %v1235, %v1241
        %v1244 = vld [vmem:[%s862] sm:$0xff]
        %v1245 = vld [vmem:[%s866] sm:$0xff]
        %v1246 = vld [vmem:[%s870] sm:$0xff]
        %v1247 = vld [vmem:[%s874] sm:$0xff]
        %v1248 = vmul.f32 %v1227, %v1244
        %1250 = vrot.lane.b32.xlu0 %v1246, 16
        %v1251 = vpop.permute.xlu0 %1250
        %v1253 = vmul.f32 %v1227, %v1251
        %1255 = vrot.lane.b32.xlu0 %v1253, 112
        %v1256 = vpop.permute.xlu0 %1255
        %v1258 = vsub.f32 %v1248, %v1256
        %1260 = vrot.lane.b32.xlu0 %v1245, 16
        %v1261 = vpop.permute.xlu0 %1260
        %v1263 = vmul.f32 %v1227, %v1261
        %v1264 = vmul.f32 %v1227, %v1247
        %1266 = vrot.lane.b32.xlu0 %v1264, 16
        %v1267 = vpop.permute.xlu0 %1266
        %v1269 = vadd.f32 %v1263, %v1267
        %v1270 = vmul.f32 %v1243, %v1244
        %v1271 = vmul.f32 %v1243, %v1251
        %1273 = vrot.lane.b32.xlu0 %v1271, 112
        %v1274 = vpop.permute.xlu0 %1273
        %v1276 = vsub.f32 %v1270, %v1274
        %v1277 = vmul.f32 %v1243, %v1261
        %v1278 = vmul.f32 %v1243, %v1247
        %1280 = vrot.lane.b32.xlu0 %v1278, 16
        %v1281 = vpop.permute.xlu0 %1280
        %v1283 = vadd.f32 %v1277, %v1281
        %1285 = vrot.lane.b32.xlu0 %v1269, 116
        %v1286 = vpop.permute.xlu0 %1285
        %vm1288 = vcmask 31744
        %v1289 = vsel %vm1288, %v1258, %v1286
        %v1290 = vpack.c.bf16 %v1289, %v1289
        %vm1291 = vcmask 60416
        %1292 = vst.msk [vmem:[%s837] sm:$0xf] %vm1291, %v1290
        %1294 = vrot.lane.b32.xlu0 %v1283, 116
        %v1295 = vpop.permute.xlu0 %1294
        %v1297 = vsel %vm1288, %v1276, %v1295
        %v1298 = vpack.c.bf16 %v1297, %v1297
        %1299 = vst.msk [vmem:[%s844] sm:$0xf] %vm1291, %v1298
        %v1300 = vpack.c.bf16 %v1207, %v1207
        %1301 = vst.msk [vmem:[%s851] sm:$0xf] %vm1291, %v1300
        %1303 = vrot.lane.b32.xlu0 %v1258, 124
        %v1304 = vpop.permute.xlu0 %1303
        %1306 = vrot.lane.b32.xlu0 %v1269, 112
        %v1307 = vpop.permute.xlu0 %1306
        %v1309 = vsel %vm1288, %v1304, %v1307
        %v1310 = vpack.c.bf16 %v1309, %v1309
        %s1311 = scalar_lea.vmem %s837, 4 [#allocation19]
        %1312 = vst.msk [vmem:[%s1311] sm:$0xf] %vm1291, %v1310
        %1314 = vrot.lane.b32.xlu0 %v1276, 124
        %v1315 = vpop.permute.xlu0 %1314
        %1317 = vrot.lane.b32.xlu0 %v1283, 112
        %v1318 = vpop.permute.xlu0 %1317
        %v1320 = vsel %vm1288, %v1315, %v1318
        %v1321 = vpack.c.bf16 %v1320, %v1320
        %s1322 = scalar_lea.vmem %s844, 4 [#allocation20]
        %1323 = vst.msk [vmem:[%s1322] sm:$0xf] %vm1291, %v1321
        %v1325 = vunpack.c.l.b16 %v1300
        %v1326 = vpack.c.b16 %v1325, %v1325
        %1327 = vrot.lane.b32.xlu0 %v1326, 120
        %v1328 = vpop.permute.xlu0 %1327
        %s1330 = scalar_lea.vmem %s851, 4 [#allocation22]
        %1331 = vst.msk [vmem:[%s1330] sm:$0xf] %vm1291, %v1328
        %1332 = vrot.lane.b32.xlu0 %v1258, 120
        %v1333 = vpop.permute.xlu0 %1332
        %1335 = vrot.lane.b32.xlu0 %v1269, 108
        %v1336 = vpop.permute.xlu0 %1335
        %v1338 = vsel %vm1288, %v1333, %v1336
        %v1339 = vpack.c.bf16 %v1338, %v1338
        %s1340 = scalar_lea.vmem %s837, 8 [#allocation19]
        %1341 = vst.msk [vmem:[%s1340] sm:$0xf] %vm1291, %v1339
        %1342 = vrot.lane.b32.xlu0 %v1276, 120
        %v1343 = vpop.permute.xlu0 %1342
        %1345 = vrot.lane.b32.xlu0 %v1283, 108
        %v1346 = vpop.permute.xlu0 %1345
        %v1348 = vsel %vm1288, %v1343, %v1346
        %v1349 = vpack.c.bf16 %v1348, %v1348
        %s1350 = scalar_lea.vmem %s844, 8 [#allocation20]
        %1351 = vst.msk [vmem:[%s1350] sm:$0xf] %vm1291, %v1349
        %1352 = vrot.lane.b32.xlu0 %v1326, 112
        %v1353 = vpop.permute.xlu0 %1352
        %s1355 = scalar_lea.vmem %s851, 8 [#allocation22]
        %1356 = vst.msk [vmem:[%s1355] sm:$0xf] %vm1291, %v1353
        %1357 = vrot.lane.b32.xlu0 %v1258, 116
        %v1358 = vpop.permute.xlu0 %1357
        %1360 = vrot.lane.b32.xlu0 %v1269, 104
        %v1361 = vpop.permute.xlu0 %1360
        %v1363 = vsel %vm1288, %v1358, %v1361
        %v1364 = vpack.c.bf16 %v1363, %v1363
        %s1365 = scalar_lea.vmem %s837, 12 [#allocation19]
        %1366 = vst.msk [vmem:[%s1365] sm:$0xf] %vm1291, %v1364
        %1367 = vrot.lane.b32.xlu0 %v1276, 116
        %v1368 = vpop.permute.xlu0 %1367
        %1370 = vrot.lane.b32.xlu0 %v1283, 104
        %v1371 = vpop.permute.xlu0 %1370
        %v1373 = vsel %vm1288, %v1368, %v1371
        %v1374 = vpack.c.bf16 %v1373, %v1373
        %s1375 = scalar_lea.vmem %s844, 12 [#allocation20]
        %1376 = vst.msk [vmem:[%s1375] sm:$0xf] %vm1291, %v1374
        %1377 = vrot.lane.b32.xlu0 %v1326, 104
        %v1378 = vpop.permute.xlu0 %1377
        %s1380 = scalar_lea.vmem %s851, 12 [#allocation22]
        %1381 = vst.msk [vmem:[%s1380] sm:$0xf] %vm1291, %v1378
        %s1382 = sand.u32 %s440, 1
        %s1383 = scalar_lea.sflag [#allocation4], %s1382
        %s1384 = sand.u32 %s440, 1
        %s1385 = smul.addr %s1384, 16
        %s1386 = scalar_lea.vmem [#allocation19], %s1385
        %s1387 = sand.u32 %s50, 1
        %s1388 = scalar_lea.sflag [#allocation21], %s1387
        %s1389 = sand.u32 %s468, 1
        %s1390 = smul.addr %s1389, 16
        %s1391 = scalar_lea.vmem [#allocation20], %s1390
        %s1392 = sand.u32 %s50, 1
        %s1393 = scalar_lea.sflag [#allocation21], %s1392
        %s1394 = sand.u32 %s496, 1
        %s1395 = smul.addr %s1394, 16
        %s1396 = scalar_lea.vmem [#allocation22], %s1395
        %s1397 = sand.u32 %s522, 1
        %s1398 = scalar_lea.sflag [#allocation24], %s1397
        %s1399 = sand.u32 %s522, 1
        %s1400 = smul.addr %s1399, 2
        %s1401 = scalar_lea.vmem [#allocation23], %s1400
        // Predicated region
        $region125: #{tpu_custom_call.1} parent=83 // pred_check
          %p1402 = pneg %p450
        $region126: #{tpu_custom_call.1} parent=83 // pred_check_branch
          %1404 = sbr.rel (%p1402) target = $region128
        $region127: #{tpu_custom_call.1} parent=83 // pred_region
          %s1406 = ssub.s32 256, 256
          %1407 = vsyncadd %s1383, %s1406
          %s1408 = smul.addr %s54, 4
          %s1409 = sadd.s32 %s55, %s1408
          %s1410 = smul.addr %s1409, 64
          %s1411 = scalar_lea.hbm %s16, %s1410
          %s1412 = sshll.u32 %s1386, 4
          %s1413 = int_to_ptr.vmem [resolvable:$true] %s1412
          %1418 = dma.vmem_to_hbm [thread:$0]  %s1413, 256, %s1411, %s1383, 64, 64, 4
        $region128: #{tpu_custom_call.1} parent=83 // pred_fallthru
          _
        // Predicated region
        $region129: #{tpu_custom_call.1} parent=83 // pred_check
          %p1419 = pneg %p478
        $region130: #{tpu_custom_call.1} parent=83 // pred_check_branch
          %1421 = sbr.rel (%p1419) target = $region132
        $region131: #{tpu_custom_call.1} parent=83 // pred_region
          %s1423 = ssub.s32 256, 256
          %1424 = vsyncadd %s1388, %s1423
          %s1425 = smul.addr %s54, 4
          %s1426 = sadd.s32 %s55, %s1425
          %s1427 = smul.addr %s1426, 64
          %s1428 = scalar_lea.hbm %s17, %s1427
          %s1429 = sshll.u32 %s1391, 4
          %s1430 = int_to_ptr.vmem [resolvable:$true] %s1429
          %1435 = dma.vmem_to_hbm [thread:$0]  %s1430, 256, %s1428, %s1388, 64, 64, 4
        $region132: #{tpu_custom_call.1} parent=83 // pred_fallthru
          _
        // Predicated region
        $region133: #{tpu_custom_call.1} parent=83 // pred_check
          %p1436 = pneg %p506
        $region134: #{tpu_custom_call.1} parent=83 // pred_check_branch
          %1438 = sbr.rel (%p1436) target = $region136
        $region135: #{tpu_custom_call.1} parent=83 // pred_region
          %s1440 = ssub.s32 256, 256
          %1441 = vsyncadd %s1393, %s1440
          %s1442 = smul.addr %s54, 4
          %s1443 = sadd.s32 %s55, %s1442
          %s1444 = smul.addr %s1443, 64
          %s1445 = scalar_lea.hbm %s18, %s1444
          %s1446 = sshll.u32 %s1396, 4
          %s1447 = int_to_ptr.vmem [resolvable:$true] %s1446
          %1452 = dma.vmem_to_hbm [thread:$0]  %s1447, 256, %s1445, %s1393, 64, 64, 4
        $region136: #{tpu_custom_call.1} parent=83 // pred_fallthru
          _
        // Predicated region
        $region137: #{tpu_custom_call.1} parent=83 // pred_check
          %p1453 = pneg %p532
        $region138: #{tpu_custom_call.1} parent=83 // pred_check_branch
          %1455 = sbr.rel (%p1453) target = $region140
        $region139: #{tpu_custom_call.1} parent=83 // pred_region
          %s1457 = ssub.s32 32, 32
          %1458 = vsyncadd %s1398, %s1457
          %s1459 = smul.addr %s54, 2
          %s1460 = smul.addr %s1459, 16
          %s1461 = scalar_lea.hbm %s19, %s1460
          %s1463 = sshll.u32 %s1401, 4
          %s1464 = int_to_ptr.vmem [resolvable:$true] %s1463
          %1466 = dma.vmem_to_hbm [thread:$0]  %s1464, 32, %s1461, %s1398
        $region140: #{tpu_custom_call.1} parent=83 // pred_fallthru
          _
      $region84: #{tpu_custom_call.1} parent=5 // pred_fallthru
        _
      %p1467 = scmp.le.s32.totalorder 2, %s45
      // Predicated region
      $region141: #{tpu_custom_call.1} parent=5 // pred_check
        %p1468 = pneg %p1467
      $region142: #{tpu_custom_call.1} parent=5 // pred_check_branch
        %1470 = sbr.rel (%p1468) target = $region144
      $region143: #{tpu_custom_call.1} parent=5 // pred_region
        %s1471 = ssub.s32 %s45, 2
        // Predicated region
        $region145: #{tpu_custom_call.1} parent=143 // pred_check
          %p1472 = pneg %p456
        $region146: #{tpu_custom_call.1} parent=143 // pred_check_branch
          %1474 = sbr.rel (%p1472) target = $region148
        $region147: #{tpu_custom_call.1} parent=143 // pred_region
          %s1475 = sand.u32 %s441, 1
          %s1476 = scalar_lea.sflag [#allocation4], %s1475
          %s1477 = sand.u32 %s441, 1
          %s1478 = smul.addr %s1477, 16
          %s1479 = scalar_lea.vmem [#allocation19], %s1478
          %1480 = dma.done %s1476, 256
        $region148: #{tpu_custom_call.1} parent=143 // pred_fallthru
          _
        // Predicated region
        $region149: #{tpu_custom_call.1} parent=143 // pred_check
          %p1481 = pneg %p484
        $region150: #{tpu_custom_call.1} parent=143 // pred_check_branch
          %1483 = sbr.rel (%p1481) target = $region152
        $region151: #{tpu_custom_call.1} parent=143 // pred_region
          %s1484 = sand.u32 %s51, 1
          %s1485 = scalar_lea.sflag [#allocation21], %s1484
          %s1486 = sand.u32 %s469, 1
          %s1487 = smul.addr %s1486, 16
          %s1488 = scalar_lea.vmem [#allocation20], %s1487
          %1489 = dma.done %s1485, 256
        $region152: #{tpu_custom_call.1} parent=143 // pred_fallthru
          _
        // Predicated region
        $region153: #{tpu_custom_call.1} parent=143 // pred_check
          %p1490 = pneg %p512
        $region154: #{tpu_custom_call.1} parent=143 // pred_check_branch
          %1492 = sbr.rel (%p1490) target = $region156
        $region155: #{tpu_custom_call.1} parent=143 // pred_region
          %s1493 = sand.u32 %s51, 1
          %s1494 = scalar_lea.sflag [#allocation21], %s1493
          %s1495 = sand.u32 %s497, 1
          %s1496 = smul.addr %s1495, 16
          %s1497 = scalar_lea.vmem [#allocation22], %s1496
          %1498 = dma.done %s1494, 256
        $region156: #{tpu_custom_call.1} parent=143 // pred_fallthru
          _
        // Predicated region
        $region157: #{tpu_custom_call.1} parent=143 // pred_check
          %p1499 = pneg %p538
        $region158: #{tpu_custom_call.1} parent=143 // pred_check_branch
          %1501 = sbr.rel (%p1499) target = $region160
        $region159: #{tpu_custom_call.1} parent=143 // pred_region
          %s1502 = sand.u32 %s523, 1
          %s1503 = scalar_lea.sflag [#allocation24], %s1502
          %s1504 = sand.u32 %s523, 1
          %s1505 = smul.addr %s1504, 2
          %s1506 = scalar_lea.vmem [#allocation23], %s1505
          %1507 = dma.done %s1503, 32
        $region160: #{tpu_custom_call.1} parent=143 // pred_fallthru
          _
      $region144: #{tpu_custom_call.1} parent=5 // pred_fallthru
        _
    $region6: #{tpu_custom_call.1} parent=1 // loop_footer
      %s49 = sadd.s32 1, %s45
    $region7: #{tpu_custom_call.1} parent=1 // loop_footer_branch
      %44 = sbr.rel target = $region3
    $region8: #{tpu_custom_call.1} parent=1 // loop_exit
      _
    %1508 = vsyncpa [#allocation3], 1
    %s1509 = scalar_lea.sflag [#allocation3], 1
    %1510 = vsyncpa %s1509, 1
    %1511 = vsyncpa [#allocation6], 1
    %s1512 = scalar_lea.sflag [#allocation6], 1
    %1513 = vsyncpa %s1512, 1
    %1514 = vsyncpa [#allocation9], 1
    %1515 = vsyncpa [#allocation12], 1
    %1516 = vsyncpa [#allocation15], 1
    %1517 = vsyncpa [#allocation18], 1
    %1518 = vsyncpa [#allocation4], 1
    %s1519 = scalar_lea.sflag [#allocation4], 1
    %1520 = vsyncpa %s1519, 1
    %1521 = vsyncpa [#allocation21], 1
    %s1522 = scalar_lea.sflag [#allocation21], 1
    %1523 = vsyncpa %s1522, 1
    %1524 = vsyncpa [#allocation24], 1
    %s1525 = scalar_lea.sflag [#allocation24], 1
    %1526 = vsyncpa %s1525, 1

</llo_original>
